<compile_context>
chip_gen: v5e
topology: v5e:2x2
jax: 0.10.0
libtpu: 0.0.40
codegen_flags: <defaults>
</compile_context>

<pallas_src>
import jax
import jax.numpy as jnp
from jax.experimental import pallas as pl
from jax.experimental.pallas import tpu as pltpu


def charcnn_kernel(ids_ref, conv0_ref, conv1_ref, cb_ref,
                   wih_ref, bfused_ref, whh_ref, bhn_ref, out_ref):
    W, Bp, Hp = out_ref.shape                    # padded, time-major output
    BW = ids_ref.shape[0]                        # W * Bp (row = t*Bp + b)
    NCp = conv0_ref.shape[0]                     # char vocab padded to 128
    f32 = jnp.float32

    # ---- one-hot embedding "gather" on the MXU -------------------------------
    ids = ids_ref[...]                           # (BW, 1) int32
    iota = jax.lax.broadcasted_iota(jnp.int32, (BW, NCp), 1)
    one_hot = (ids == iota).astype(f32)          # (BW, NCp) -- one compare pass

    # ---- Conv1d(H, H, 2): two accumulated dots on precomposed tables --------
    e0 = jnp.dot(one_hot, conv0_ref[...],
                 preferred_element_type=f32).reshape(W, Bp, Hp)
    e1 = jnp.dot(one_hot, conv1_ref[...],
                 preferred_element_type=f32).reshape(W, Bp, Hp)
    c = e0[:W - 1] + e1[1:] + cb_ref[...]        # (W-1, Bp, Hp), free t-slices

    # ---- AvgPool1d(2) + tanh + sum over pooled time  ->  p (Bp, Hp) ----------
    Lp = (W - 1) // 2
    cp = c[:2 * Lp].reshape(Lp, 2, Bp, Hp)
    p = jnp.sum(jnp.tanh(jnp.mean(cp, axis=1)), axis=0)       # (Bp, Hp)

    # ---- GRU: hoisted input projection (with b_ih + b_hr/b_hz folded in) -----
    gi_all = (jnp.dot(one_hot, wih_ref[...], preferred_element_type=f32)
              + bfused_ref[...]).reshape(W, Bp, 3 * Hp)        # time-major
    w_hh = whh_ref[...]                                        # (Hp, 3Hp)
    b_hn = bhn_ref[...]                                        # (1, Hp)

    h = jnp.zeros((Bp, Hp), f32)
    for t in range(W):                           # W small & static -> unroll
        gi = gi_all[t]                           # free leading-axis view
        gh = jnp.dot(h, w_hh, preferred_element_type=f32)      # only op on chain
        r = jax.nn.sigmoid(gi[:, :Hp] + gh[:, :Hp])
        z = jax.nn.sigmoid(gi[:, Hp:2 * Hp] + gh[:, Hp:2 * Hp])
        n = jnp.tanh(gi[:, 2 * Hp:] + r * (gh[:, 2 * Hp:] + b_hn))
        h = (1.0 - z) * n + z * h
        out_ref[t] = h + p                       # lane-dense (Bp, Hp) store


def _round_up(x, m):
    return ((x + m - 1) // m) * m


def prepare_charcnn_params(params):
    """One-time weight prep: padding, transposition, table precomposition.

    Call once at parameter load; the per-call path only touches the ids.
    """
    f32 = jnp.float32
    hi = jax.lax.Precision.HIGHEST               # precomposition is init-time; keep it exact
    table_raw = params['embedding'].astype(f32)  # (NC, H)
    NC, H = table_raw.shape
    Hp = _round_up(H, 128)
    NCp = _round_up(NC, 128)                     # pad vocab to 128 lanes for the one-hot matmul

    table = jnp.pad(table_raw, ((0, NCp - NC), (0, Hp - H)))   # (NCp, Hp)

    def pad_hh(m):                               # (H, H) -> (Hp, Hp)
        return jnp.pad(m.astype(f32), ((0, Hp - H), (0, Hp - H)))

    def pad_vec(v):                              # (H,) -> (Hp,)
        return jnp.pad(v.astype(f32), (0, Hp - H))

    # Precomposed conv taps: e_k = one_hot @ (table @ W_k^T)
    conv0 = jnp.dot(table, pad_hh(params['conv_w'][:, :, 0].T), precision=hi)
    conv1 = jnp.dot(table, pad_hh(params['conv_w'][:, :, 1].T), precision=hi)
    conv_b = pad_vec(params['conv_b']).reshape(1, Hp)

    def pad_gru_w(w):                            # (3H, H) -> (Hp, 3Hp), per-gate blocks
        return jnp.concatenate(
            [pad_hh(w[g * H:(g + 1) * H, :].T) for g in range(3)], axis=1)

    w_ih_p = pad_gru_w(params['w_ih'])
    w_hh_p = pad_gru_w(params['w_hh'])
    wih_comp = jnp.dot(table, w_ih_p, precision=hi)            # (NCp, 3Hp)

    b_ih = params['b_ih'].astype(f32)
    b_hh = params['b_hh'].astype(f32)
    # Fold b_ih (all gates) + b_hr + b_hz into the hoisted projection.
    # b_hn stays separate (PyTorch GRU: n = tanh(gi_n + r*(gh_n + b_hn))).
    bias_fused = jnp.concatenate([
        pad_vec(b_ih[:H] + b_hh[:H]),
        pad_vec(b_ih[H:2 * H] + b_hh[H:2 * H]),
        pad_vec(b_ih[2 * H:]),
    ]).reshape(1, 3 * Hp)
    b_hn = pad_vec(b_hh[2 * H:]).reshape(1, Hp)

    return {
        'conv0': conv0, 'conv1': conv1, 'conv_b': conv_b,
        'wih_comp': wih_comp, 'bias_fused': bias_fused,
        'w_hh': w_hh_p, 'b_hn': b_hn,
        'H': H, 'Hp': Hp, 'NCp': NCp,
    }


def charcnn_forward(inputs, input_masks, prepared):
    """inputs: (B, W) int32 char ids.  input_masks is unused (as in PyTorch)."""
    del input_masks                              # unused by the reference too
    B, W = inputs.shape
    H, Hp, NCp = prepared['H'], prepared['Hp'], prepared['NCp']
    Bp = _round_up(B, 8)                         # sublane-pad batch
    f32 = jnp.float32

    # Time-major ids: row = t*Bp + b.  Padded batch rows carry id 0 (discarded).
    ids = jnp.zeros((Bp, W), jnp.int32).at[:B, :].set(inputs.astype(jnp.int32))
    ids = ids.T.reshape(W * Bp, 1)

    args = (ids, prepared['conv0'], prepared['conv1'], prepared['conv_b'],
            prepared['wih_comp'], prepared['bias_fused'],
            prepared['w_hh'], prepared['b_hn'])

    cost = pl.CostEstimate(
        flops=(2 * W * Bp * NCp * Hp * 2             # precomposed conv taps
               + 2 * W * Bp * NCp * 3 * Hp           # GRU input projection
               + 2 * W * Bp * Hp * 3 * Hp            # GRU recurrence
               + 14 * W * Bp * Hp),                  # gate / pool elementwise
        transcendentals=Bp * ((W - 1) // 2) * Hp + 3 * W * Bp * Hp,
        bytes_accessed=sum(int(a.size) * a.dtype.itemsize for a in args)
                       + W * Bp * Hp * 4)

    vmem = pl.BlockSpec(memory_space=pltpu.MemorySpace.VMEM)
    out = pl.pallas_call(
        charcnn_kernel,
        out_shape=jax.ShapeDtypeStruct((W, Bp, Hp), f32),
        in_specs=[vmem] * len(args),
        out_specs=vmem,
        cost_estimate=cost,
    )(*args)
    return out[:, :B, :H]                            # strip padding -> (W, B, H)


def charcnn_reference(inputs, params):
    """Pure-JAX reference replicating the PyTorch forward semantics."""
    emb_table = params['embedding']
    B, W = inputs.shape
    H = emb_table.shape[1]
    emb = jnp.take(emb_table, inputs, axis=0).astype(jnp.float32)   # (B, W, H)

    cw0 = params['conv_w'][:, :, 0]
    cw1 = params['conv_w'][:, :, 1]
    c = (jnp.einsum('bti,oi->bto', emb[:, :-1, :], cw0)
         + jnp.einsum('bti,oi->bto', emb[:, 1:, :], cw1)
         + params['conv_b'][None, None, :])                         # (B, W-1, H)
    Lp = (W - 1) // 2
    c = c[:, :2 * Lp, :].reshape(B, Lp, 2, H)
    p = jnp.sum(jnp.tanh(jnp.mean(c, axis=2)), axis=1)              # (B, H)

    w_ih, b_ih = params['w_ih'], params['b_ih']
    w_hh, b_hh = params['w_hh'], params['b_hh']
    h = jnp.zeros((B, H), jnp.float32)
    outs = []
    for t in range(W):
        x_t = emb[:, t, :]
        gi = x_t @ w_ih.T + b_ih
        gh = h @ w_hh.T + b_hh
        r = jax.nn.sigmoid(gi[:, :H] + gh[:, :H])
        z = jax.nn.sigmoid(gi[:, H:2 * H] + gh[:, H:2 * H])
        n = jnp.tanh(gi[:, 2 * H:] + r * gh[:, 2 * H:])
        h = (1.0 - z) * n + z * h
        outs.append(h)
    rnn_out = jnp.stack(outs, axis=0)                               # (W, B, H)
    return rnn_out + p[None, :, :]


if __name__ == "__main__":
    # Small shapes consistent with the module's forward.
    NUM_CHARS, HIDDEN = 16, 32
    BATCH, WIDTH = 2, 8

    key = jax.random.PRNGKey(0)
    ks = jax.random.split(key, 8)
    params = {
        'embedding': 0.1 * jax.random.normal(ks[0], (NUM_CHARS, HIDDEN), jnp.float32),
        'conv_w':    0.1 * jax.random.normal(ks[1], (HIDDEN, HIDDEN, 2), jnp.float32),
        'conv_b':    0.1 * jax.random.normal(ks[2], (HIDDEN,), jnp.float32),
        'w_ih':      0.1 * jax.random.normal(ks[3], (3 * HIDDEN, HIDDEN), jnp.float32),
        'b_ih':      0.1 * jax.random.normal(ks[4], (3 * HIDDEN,), jnp.float32),
        'w_hh':      0.1 * jax.random.normal(ks[5], (3 * HIDDEN, HIDDEN), jnp.float32),
        'b_hh':      0.1 * jax.random.normal(ks[6], (3 * HIDDEN,), jnp.float32),
    }
    inputs = jax.random.randint(ks[7], (BATCH, WIDTH), 0, NUM_CHARS, jnp.int32)
    input_masks = jnp.ones((BATCH, WIDTH), jnp.float32)   # unused (as in PyTorch)

    ref = charcnn_reference(inputs, params)

    # Weight prep happens ONCE (off the per-call path), as the review requested.
    prepared = jax.tree_util.tree_map(
        lambda x: jax.block_until_ready(x) if isinstance(x, jnp.ndarray) else x,
        prepare_charcnn_params(params))

    out = jax.block_until_ready(charcnn_forward(inputs, input_masks, prepared))
    assert out.shape == (WIDTH, BATCH, HIDDEN), out.shape
    assert jnp.allclose(out, ref, atol=2e-3, rtol=2e-3), \
        float(jnp.max(jnp.abs(out - ref)))

    print("KERNEL_OK")
</pallas_src>

<mosaic_0001>
module attributes {stable_mosaic.version = 11 : i64} {
  func.func @charcnn_kernel(%arg0: memref<64x1xi32, #tpu.memory_space<vmem>>, %arg1: memref<128x128xf32, #tpu.memory_space<vmem>>, %arg2: memref<128x128xf32, #tpu.memory_space<vmem>>, %arg3: memref<1x128xf32, #tpu.memory_space<vmem>>, %arg4: memref<128x384xf32, #tpu.memory_space<vmem>>, %arg5: memref<1x384xf32, #tpu.memory_space<vmem>>, %arg6: memref<128x384xf32, #tpu.memory_space<vmem>>, %arg7: memref<1x128xf32, #tpu.memory_space<vmem>>, %arg8: memref<8x8x128xf32, #tpu.memory_space<vmem>>) attributes {dimension_semantics = [], scalar_prefetch = 0 : i64, scratch_operands = 0 : i64, tpu.core_type = #tpu.core_type<tc>} {
    %c0 = arith.constant 0 : index
    %c0_0 = arith.constant 0 : index
    %0 = vector.load %arg0[%c0, %c0_0] : memref<64x1xi32, #tpu.memory_space<vmem>>, vector<64x1xi32>
    %1 = tpu.iota {dimensions = array<i32: 1>} : vector<64x128xi32>
    %2 = vector.broadcast %0 : vector<64x1xi32> to vector<64x128xi32>
    %3 = arith.cmpi eq, %2, %1 : vector<64x128xi32>
    %4 = arith.extui %3 : vector<64x128xi1> to vector<64x128xi32>
    %5 = arith.sitofp %4 : vector<64x128xi32> to vector<64x128xf32>
    %c0_1 = arith.constant 0 : index
    %c0_2 = arith.constant 0 : index
    %6 = vector.load %arg1[%c0_1, %c0_2] : memref<128x128xf32, #tpu.memory_space<vmem>>, vector<128x128xf32>
    %cst = arith.constant dense<0.000000e+00> : vector<64x128xf32>
    %7 = tpu.matmul %5, %6, %cst {dimension_numbers = #tpu.dot_dimension_numbers<[1], [0], [0], [1], [0, 0, 1, 1], [], []>} : vector<64x128xf32>, vector<128x128xf32>, vector<64x128xf32> -> vector<64x128xf32>
    %8 = vector.shape_cast %7 : vector<64x128xf32> to vector<8x8x128xf32>
    %c0_3 = arith.constant 0 : index
    %c0_4 = arith.constant 0 : index
    %9 = vector.load %arg2[%c0_3, %c0_4] : memref<128x128xf32, #tpu.memory_space<vmem>>, vector<128x128xf32>
    %cst_5 = arith.constant dense<0.000000e+00> : vector<64x128xf32>
    %10 = tpu.matmul %5, %9, %cst_5 {dimension_numbers = #tpu.dot_dimension_numbers<[1], [0], [0], [1], [0, 0, 1, 1], [], []>} : vector<64x128xf32>, vector<128x128xf32>, vector<64x128xf32> -> vector<64x128xf32>
    %11 = vector.shape_cast %10 : vector<64x128xf32> to vector<8x8x128xf32>
    %12 = vector.extract_strided_slice %8 {offsets = [0, 0, 0], sizes = [7, 8, 128], strides = [1, 1, 1]} : vector<8x8x128xf32> to vector<7x8x128xf32>
    %13 = vector.extract_strided_slice %11 {offsets = [1, 0, 0], sizes = [7, 8, 128], strides = [1, 1, 1]} : vector<8x8x128xf32> to vector<7x8x128xf32>
    %14 = arith.addf %12, %13 : vector<7x8x128xf32>
    %c0_6 = arith.constant 0 : index
    %c0_7 = arith.constant 0 : index
    %15 = vector.load %arg3[%c0_6, %c0_7] : memref<1x128xf32, #tpu.memory_space<vmem>>, vector<1x128xf32>
    %16 = vector.shape_cast %15 : vector<1x128xf32> to vector<1x1x128xf32>
    %17 = vector.broadcast %16 : vector<1x1x128xf32> to vector<7x8x128xf32>
    %18 = arith.addf %14, %17 : vector<7x8x128xf32>
    %19 = vector.extract_strided_slice %18 {offsets = [0, 0, 0], sizes = [6, 8, 128], strides = [1, 1, 1]} : vector<7x8x128xf32> to vector<6x8x128xf32>
    %20 = vector.shape_cast %19 : vector<6x8x128xf32> to vector<3x2x8x128xf32>
    %cst_8 = arith.constant dense<0.000000e+00> : vector<3x8x128xf32>
    %21 = vector.multi_reduction <add>, %20, %cst_8 [1] : vector<3x2x8x128xf32> to vector<3x8x128xf32>
    %cst_9 = arith.constant 2.000000e+00 : f32
    %22 = vector.broadcast %cst_9 : f32 to vector<3x8x128xf32>
    %23 = arith.divf %21, %22 : vector<3x8x128xf32>
    %24 = math.tanh %23 : vector<3x8x128xf32>
    %cst_10 = arith.constant dense<0.000000e+00> : vector<8x128xf32>
    %25 = vector.multi_reduction <add>, %24, %cst_10 [0] : vector<3x8x128xf32> to vector<8x128xf32>
    %c0_11 = arith.constant 0 : index
    %c0_12 = arith.constant 0 : index
    %26 = vector.load %arg4[%c0_11, %c0_12] : memref<128x384xf32, #tpu.memory_space<vmem>>, vector<128x384xf32>
    %cst_13 = arith.constant dense<0.000000e+00> : vector<64x384xf32>
    %27 = tpu.matmul %5, %26, %cst_13 {dimension_numbers = #tpu.dot_dimension_numbers<[1], [0], [0], [1], [0, 0, 1, 1], [], []>} : vector<64x128xf32>, vector<128x384xf32>, vector<64x384xf32> -> vector<64x384xf32>
    %c0_14 = arith.constant 0 : index
    %c0_15 = arith.constant 0 : index
    %28 = vector.load %arg5[%c0_14, %c0_15] : memref<1x384xf32, #tpu.memory_space<vmem>>, vector<1x384xf32>
    %29 = vector.broadcast %28 : vector<1x384xf32> to vector<64x384xf32>
    %30 = arith.addf %27, %29 : vector<64x384xf32>
    %31 = vector.shape_cast %30 : vector<64x384xf32> to vector<8x8x384xf32>
    %c0_16 = arith.constant 0 : index
    %c0_17 = arith.constant 0 : index
    %32 = vector.load %arg6[%c0_16, %c0_17] : memref<128x384xf32, #tpu.memory_space<vmem>>, vector<128x384xf32>
    %c0_18 = arith.constant 0 : index
    %c0_19 = arith.constant 0 : index
    %33 = vector.load %arg7[%c0_18, %c0_19] : memref<1x128xf32, #tpu.memory_space<vmem>>, vector<1x128xf32>
    %cst_20 = arith.constant 0.000000e+00 : f32
    %34 = vector.broadcast %cst_20 : f32 to vector<8x128xf32>
    %35 = vector.extract_strided_slice %31 {offsets = [0, 0, 0], sizes = [1, 8, 384], strides = [1, 1, 1]} : vector<8x8x384xf32> to vector<1x8x384xf32>
    %36 = vector.shape_cast %35 : vector<1x8x384xf32> to vector<8x384xf32>
    %cst_21 = arith.constant dense<0.000000e+00> : vector<8x384xf32>
    %37 = tpu.matmul %34, %32, %cst_21 {dimension_numbers = #tpu.dot_dimension_numbers<[1], [0], [0], [1], [0, 0, 1, 1], [], []>} : vector<8x128xf32>, vector<128x384xf32>, vector<8x384xf32> -> vector<8x384xf32>
    %38 = vector.extract_strided_slice %36 {offsets = [0, 0], sizes = [8, 128], strides = [1, 1]} : vector<8x384xf32> to vector<8x128xf32>
    %39 = vector.extract_strided_slice %37 {offsets = [0, 0], sizes = [8, 128], strides = [1, 1]} : vector<8x384xf32> to vector<8x128xf32>
    %40 = arith.addf %38, %39 : vector<8x128xf32>
    %41 = arith.negf %40 : vector<8x128xf32>
    %42 = math.exp %41 : vector<8x128xf32>
    %cst_22 = arith.constant 1.000000e+00 : f32
    %43 = vector.broadcast %cst_22 : f32 to vector<8x128xf32>
    %44 = arith.addf %43, %42 : vector<8x128xf32>
    %45 = arith.divf %43, %44 : vector<8x128xf32>
    %46 = vector.extract_strided_slice %36 {offsets = [0, 128], sizes = [8, 128], strides = [1, 1]} : vector<8x384xf32> to vector<8x128xf32>
    %47 = vector.extract_strided_slice %37 {offsets = [0, 128], sizes = [8, 128], strides = [1, 1]} : vector<8x384xf32> to vector<8x128xf32>
    %48 = arith.addf %46, %47 : vector<8x128xf32>
    %49 = arith.negf %48 : vector<8x128xf32>
    %50 = math.exp %49 : vector<8x128xf32>
    %cst_23 = arith.constant 1.000000e+00 : f32
    %51 = vector.broadcast %cst_23 : f32 to vector<8x128xf32>
    %52 = arith.addf %51, %50 : vector<8x128xf32>
    %53 = arith.divf %51, %52 : vector<8x128xf32>
    %54 = vector.extract_strided_slice %36 {offsets = [0, 256], sizes = [8, 128], strides = [1, 1]} : vector<8x384xf32> to vector<8x128xf32>
    %55 = vector.extract_strided_slice %37 {offsets = [0, 256], sizes = [8, 128], strides = [1, 1]} : vector<8x384xf32> to vector<8x128xf32>
    %56 = vector.broadcast %33 : vector<1x128xf32> to vector<8x128xf32>
    %57 = arith.addf %55, %56 : vector<8x128xf32>
    %58 = arith.mulf %45, %57 : vector<8x128xf32>
    %59 = arith.addf %54, %58 : vector<8x128xf32>
    %60 = math.tanh %59 : vector<8x128xf32>
    %cst_24 = arith.constant 1.000000e+00 : f32
    %61 = vector.broadcast %cst_24 : f32 to vector<8x128xf32>
    %62 = arith.subf %61, %53 : vector<8x128xf32>
    %63 = arith.mulf %62, %60 : vector<8x128xf32>
    %64 = arith.mulf %53, %34 : vector<8x128xf32>
    %65 = arith.addf %63, %64 : vector<8x128xf32>
    %66 = arith.addf %65, %25 : vector<8x128xf32>
    %c0_25 = arith.constant 0 : index
    %c0_26 = arith.constant 0 : index
    %c0_27 = arith.constant 0 : index
    %67 = vector.load %arg8[%c0_25, %c0_26, %c0_27] : memref<8x8x128xf32, #tpu.memory_space<vmem>>, vector<1x8x128xf32>
    %68 = vector.shape_cast %67 : vector<1x8x128xf32> to vector<8x128xf32>
    %69 = vector.shape_cast %66 : vector<8x128xf32> to vector<1x8x128xf32>
    tpu.vector_store %arg8[%c0_25, %c0_26, %c0_27], %69 {strides = array<i32>} : memref<8x8x128xf32, #tpu.memory_space<vmem>>, vector<1x8x128xf32>,
    %70 = vector.extract_strided_slice %31 {offsets = [1, 0, 0], sizes = [1, 8, 384], strides = [1, 1, 1]} : vector<8x8x384xf32> to vector<1x8x384xf32>
    %71 = vector.shape_cast %70 : vector<1x8x384xf32> to vector<8x384xf32>
    %cst_28 = arith.constant dense<0.000000e+00> : vector<8x384xf32>
    %72 = tpu.matmul %65, %32, %cst_28 {dimension_numbers = #tpu.dot_dimension_numbers<[1], [0], [0], [1], [0, 0, 1, 1], [], []>} : vector<8x128xf32>, vector<128x384xf32>, vector<8x384xf32> -> vector<8x384xf32>
    %73 = vector.extract_strided_slice %71 {offsets = [0, 0], sizes = [8, 128], strides = [1, 1]} : vector<8x384xf32> to vector<8x128xf32>
    %74 = vector.extract_strided_slice %72 {offsets = [0, 0], sizes = [8, 128], strides = [1, 1]} : vector<8x384xf32> to vector<8x128xf32>
    %75 = arith.addf %73, %74 : vector<8x128xf32>
    %76 = arith.negf %75 : vector<8x128xf32>
    %77 = math.exp %76 : vector<8x128xf32>
    %cst_29 = arith.constant 1.000000e+00 : f32
    %78 = vector.broadcast %cst_29 : f32 to vector<8x128xf32>
    %79 = arith.addf %78, %77 : vector<8x128xf32>
    %80 = arith.divf %78, %79 : vector<8x128xf32>
    %81 = vector.extract_strided_slice %71 {offsets = [0, 128], sizes = [8, 128], strides = [1, 1]} : vector<8x384xf32> to vector<8x128xf32>
    %82 = vector.extract_strided_slice %72 {offsets = [0, 128], sizes = [8, 128], strides = [1, 1]} : vector<8x384xf32> to vector<8x128xf32>
    %83 = arith.addf %81, %82 : vector<8x128xf32>
    %84 = arith.negf %83 : vector<8x128xf32>
    %85 = math.exp %84 : vector<8x128xf32>
    %cst_30 = arith.constant 1.000000e+00 : f32
    %86 = vector.broadcast %cst_30 : f32 to vector<8x128xf32>
    %87 = arith.addf %86, %85 : vector<8x128xf32>
    %88 = arith.divf %86, %87 : vector<8x128xf32>
    %89 = vector.extract_strided_slice %71 {offsets = [0, 256], sizes = [8, 128], strides = [1, 1]} : vector<8x384xf32> to vector<8x128xf32>
    %90 = vector.extract_strided_slice %72 {offsets = [0, 256], sizes = [8, 128], strides = [1, 1]} : vector<8x384xf32> to vector<8x128xf32>
    %91 = vector.broadcast %33 : vector<1x128xf32> to vector<8x128xf32>
    %92 = arith.addf %90, %91 : vector<8x128xf32>
    %93 = arith.mulf %80, %92 : vector<8x128xf32>
    %94 = arith.addf %89, %93 : vector<8x128xf32>
    %95 = math.tanh %94 : vector<8x128xf32>
    %cst_31 = arith.constant 1.000000e+00 : f32
    %96 = vector.broadcast %cst_31 : f32 to vector<8x128xf32>
    %97 = arith.subf %96, %88 : vector<8x128xf32>
    %98 = arith.mulf %97, %95 : vector<8x128xf32>
    %99 = arith.mulf %88, %65 : vector<8x128xf32>
    %100 = arith.addf %98, %99 : vector<8x128xf32>
    %101 = arith.addf %100, %25 : vector<8x128xf32>
    %c1 = arith.constant 1 : index
    %c0_32 = arith.constant 0 : index
    %c0_33 = arith.constant 0 : index
    %102 = vector.load %arg8[%c1, %c0_32, %c0_33] : memref<8x8x128xf32, #tpu.memory_space<vmem>>, vector<1x8x128xf32>
    %103 = vector.shape_cast %102 : vector<1x8x128xf32> to vector<8x128xf32>
    %104 = vector.shape_cast %101 : vector<8x128xf32> to vector<1x8x128xf32>
    tpu.vector_store %arg8[%c1, %c0_32, %c0_33], %104 {strides = array<i32>} : memref<8x8x128xf32, #tpu.memory_space<vmem>>, vector<1x8x128xf32>,
    %105 = vector.extract_strided_slice %31 {offsets = [2, 0, 0], sizes = [1, 8, 384], strides = [1, 1, 1]} : vector<8x8x384xf32> to vector<1x8x384xf32>
    %106 = vector.shape_cast %105 : vector<1x8x384xf32> to vector<8x384xf32>
    %cst_34 = arith.constant dense<0.000000e+00> : vector<8x384xf32>
    %107 = tpu.matmul %100, %32, %cst_34 {dimension_numbers = #tpu.dot_dimension_numbers<[1], [0], [0], [1], [0, 0, 1, 1], [], []>} : vector<8x128xf32>, vector<128x384xf32>, vector<8x384xf32> -> vector<8x384xf32>
    %108 = vector.extract_strided_slice %106 {offsets = [0, 0], sizes = [8, 128], strides = [1, 1]} : vector<8x384xf32> to vector<8x128xf32>
    %109 = vector.extract_strided_slice %107 {offsets = [0, 0], sizes = [8, 128], strides = [1, 1]} : vector<8x384xf32> to vector<8x128xf32>
    %110 = arith.addf %108, %109 : vector<8x128xf32>
    %111 = arith.negf %110 : vector<8x128xf32>
    %112 = math.exp %111 : vector<8x128xf32>
    %cst_35 = arith.constant 1.000000e+00 : f32
    %113 = vector.broadcast %cst_35 : f32 to vector<8x128xf32>
    %114 = arith.addf %113, %112 : vector<8x128xf32>
    %115 = arith.divf %113, %114 : vector<8x128xf32>
    %116 = vector.extract_strided_slice %106 {offsets = [0, 128], sizes = [8, 128], strides = [1, 1]} : vector<8x384xf32> to vector<8x128xf32>
    %117 = vector.extract_strided_slice %107 {offsets = [0, 128], sizes = [8, 128], strides = [1, 1]} : vector<8x384xf32> to vector<8x128xf32>
    %118 = arith.addf %116, %117 : vector<8x128xf32>
    %119 = arith.negf %118 : vector<8x128xf32>
    %120 = math.exp %119 : vector<8x128xf32>
    %cst_36 = arith.constant 1.000000e+00 : f32
    %121 = vector.broadcast %cst_36 : f32 to vector<8x128xf32>
    %122 = arith.addf %121, %120 : vector<8x128xf32>
    %123 = arith.divf %121, %122 : vector<8x128xf32>
    %124 = vector.extract_strided_slice %106 {offsets = [0, 256], sizes = [8, 128], strides = [1, 1]} : vector<8x384xf32> to vector<8x128xf32>
    %125 = vector.extract_strided_slice %107 {offsets = [0, 256], sizes = [8, 128], strides = [1, 1]} : vector<8x384xf32> to vector<8x128xf32>
    %126 = vector.broadcast %33 : vector<1x128xf32> to vector<8x128xf32>
    %127 = arith.addf %125, %126 : vector<8x128xf32>
    %128 = arith.mulf %115, %127 : vector<8x128xf32>
    %129 = arith.addf %124, %128 : vector<8x128xf32>
    %130 = math.tanh %129 : vector<8x128xf32>
    %cst_37 = arith.constant 1.000000e+00 : f32
    %131 = vector.broadcast %cst_37 : f32 to vector<8x128xf32>
    %132 = arith.subf %131, %123 : vector<8x128xf32>
    %133 = arith.mulf %132, %130 : vector<8x128xf32>
    %134 = arith.mulf %123, %100 : vector<8x128xf32>
    %135 = arith.addf %133, %134 : vector<8x128xf32>
    %136 = arith.addf %135, %25 : vector<8x128xf32>
    %c2 = arith.constant 2 : index
    %c0_38 = arith.constant 0 : index
    %c0_39 = arith.constant 0 : index
    %137 = vector.load %arg8[%c2, %c0_38, %c0_39] : memref<8x8x128xf32, #tpu.memory_space<vmem>>, vector<1x8x128xf32>
    %138 = vector.shape_cast %137 : vector<1x8x128xf32> to vector<8x128xf32>
    %139 = vector.shape_cast %136 : vector<8x128xf32> to vector<1x8x128xf32>
    tpu.vector_store %arg8[%c2, %c0_38, %c0_39], %139 {strides = array<i32>} : memref<8x8x128xf32, #tpu.memory_space<vmem>>, vector<1x8x128xf32>,
    %140 = vector.extract_strided_slice %31 {offsets = [3, 0, 0], sizes = [1, 8, 384], strides = [1, 1, 1]} : vector<8x8x384xf32> to vector<1x8x384xf32>
    %141 = vector.shape_cast %140 : vector<1x8x384xf32> to vector<8x384xf32>
    %cst_40 = arith.constant dense<0.000000e+00> : vector<8x384xf32>
    %142 = tpu.matmul %135, %32, %cst_40 {dimension_numbers = #tpu.dot_dimension_numbers<[1], [0], [0], [1], [0, 0, 1, 1], [], []>} : vector<8x128xf32>, vector<128x384xf32>, vector<8x384xf32> -> vector<8x384xf32>
    %143 = vector.extract_strided_slice %141 {offsets = [0, 0], sizes = [8, 128], strides = [1, 1]} : vector<8x384xf32> to vector<8x128xf32>
    %144 = vector.extract_strided_slice %142 {offsets = [0, 0], sizes = [8, 128], strides = [1, 1]} : vector<8x384xf32> to vector<8x128xf32>
    %145 = arith.addf %143, %144 : vector<8x128xf32>
    %146 = arith.negf %145 : vector<8x128xf32>
    %147 = math.exp %146 : vector<8x128xf32>
    %cst_41 = arith.constant 1.000000e+00 : f32
    %148 = vector.broadcast %cst_41 : f32 to vector<8x128xf32>
    %149 = arith.addf %148, %147 : vector<8x128xf32>
    %150 = arith.divf %148, %149 : vector<8x128xf32>
    %151 = vector.extract_strided_slice %141 {offsets = [0, 128], sizes = [8, 128], strides = [1, 1]} : vector<8x384xf32> to vector<8x128xf32>
    %152 = vector.extract_strided_slice %142 {offsets = [0, 128], sizes = [8, 128], strides = [1, 1]} : vector<8x384xf32> to vector<8x128xf32>
    %153 = arith.addf %151, %152 : vector<8x128xf32>
    %154 = arith.negf %153 : vector<8x128xf32>
    %155 = math.exp %154 : vector<8x128xf32>
    %cst_42 = arith.constant 1.000000e+00 : f32
    %156 = vector.broadcast %cst_42 : f32 to vector<8x128xf32>
    %157 = arith.addf %156, %155 : vector<8x128xf32>
    %158 = arith.divf %156, %157 : vector<8x128xf32>
    %159 = vector.extract_strided_slice %141 {offsets = [0, 256], sizes = [8, 128], strides = [1, 1]} : vector<8x384xf32> to vector<8x128xf32>
    %160 = vector.extract_strided_slice %142 {offsets = [0, 256], sizes = [8, 128], strides = [1, 1]} : vector<8x384xf32> to vector<8x128xf32>
    %161 = vector.broadcast %33 : vector<1x128xf32> to vector<8x128xf32>
    %162 = arith.addf %160, %161 : vector<8x128xf32>
    %163 = arith.mulf %150, %162 : vector<8x128xf32>
    %164 = arith.addf %159, %163 : vector<8x128xf32>
    %165 = math.tanh %164 : vector<8x128xf32>
    %cst_43 = arith.constant 1.000000e+00 : f32
    %166 = vector.broadcast %cst_43 : f32 to vector<8x128xf32>
    %167 = arith.subf %166, %158 : vector<8x128xf32>
    %168 = arith.mulf %167, %165 : vector<8x128xf32>
    %169 = arith.mulf %158, %135 : vector<8x128xf32>
    %170 = arith.addf %168, %169 : vector<8x128xf32>
    %171 = arith.addf %170, %25 : vector<8x128xf32>
    %c3 = arith.constant 3 : index
    %c0_44 = arith.constant 0 : index
    %c0_45 = arith.constant 0 : index
    %172 = vector.load %arg8[%c3, %c0_44, %c0_45] : memref<8x8x128xf32, #tpu.memory_space<vmem>>, vector<1x8x128xf32>
    %173 = vector.shape_cast %172 : vector<1x8x128xf32> to vector<8x128xf32>
    %174 = vector.shape_cast %171 : vector<8x128xf32> to vector<1x8x128xf32>
    tpu.vector_store %arg8[%c3, %c0_44, %c0_45], %174 {strides = array<i32>} : memref<8x8x128xf32, #tpu.memory_space<vmem>>, vector<1x8x128xf32>,
    %175 = vector.extract_strided_slice %31 {offsets = [4, 0, 0], sizes = [1, 8, 384], strides = [1, 1, 1]} : vector<8x8x384xf32> to vector<1x8x384xf32>
    %176 = vector.shape_cast %175 : vector<1x8x384xf32> to vector<8x384xf32>
    %cst_46 = arith.constant dense<0.000000e+00> : vector<8x384xf32>
    %177 = tpu.matmul %170, %32, %cst_46 {dimension_numbers = #tpu.dot_dimension_numbers<[1], [0], [0], [1], [0, 0, 1, 1], [], []>} : vector<8x128xf32>, vector<128x384xf32>, vector<8x384xf32> -> vector<8x384xf32>
    %178 = vector.extract_strided_slice %176 {offsets = [0, 0], sizes = [8, 128], strides = [1, 1]} : vector<8x384xf32> to vector<8x128xf32>
    %179 = vector.extract_strided_slice %177 {offsets = [0, 0], sizes = [8, 128], strides = [1, 1]} : vector<8x384xf32> to vector<8x128xf32>
    %180 = arith.addf %178, %179 : vector<8x128xf32>
    %181 = arith.negf %180 : vector<8x128xf32>
    %182 = math.exp %181 : vector<8x128xf32>
    %cst_47 = arith.constant 1.000000e+00 : f32
    %183 = vector.broadcast %cst_47 : f32 to vector<8x128xf32>
    %184 = arith.addf %183, %182 : vector<8x128xf32>
    %185 = arith.divf %183, %184 : vector<8x128xf32>
    %186 = vector.extract_strided_slice %176 {offsets = [0, 128], sizes = [8, 128], strides = [1, 1]} : vector<8x384xf32> to vector<8x128xf32>
    %187 = vector.extract_strided_slice %177 {offsets = [0, 128], sizes = [8, 128], strides = [1, 1]} : vector<8x384xf32> to vector<8x128xf32>
    %188 = arith.addf %186, %187 : vector<8x128xf32>
    %189 = arith.negf %188 : vector<8x128xf32>
    %190 = math.exp %189 : vector<8x128xf32>
    %cst_48 = arith.constant 1.000000e+00 : f32
    %191 = vector.broadcast %cst_48 : f32 to vector<8x128xf32>
    %192 = arith.addf %191, %190 : vector<8x128xf32>
    %193 = arith.divf %191, %192 : vector<8x128xf32>
    %194 = vector.extract_strided_slice %176 {offsets = [0, 256], sizes = [8, 128], strides = [1, 1]} : vector<8x384xf32> to vector<8x128xf32>
    %195 = vector.extract_strided_slice %177 {offsets = [0, 256], sizes = [8, 128], strides = [1, 1]} : vector<8x384xf32> to vector<8x128xf32>
    %196 = vector.broadcast %33 : vector<1x128xf32> to vector<8x128xf32>
    %197 = arith.addf %195, %196 : vector<8x128xf32>
    %198 = arith.mulf %185, %197 : vector<8x128xf32>
    %199 = arith.addf %194, %198 : vector<8x128xf32>
    %200 = math.tanh %199 : vector<8x128xf32>
    %cst_49 = arith.constant 1.000000e+00 : f32
    %201 = vector.broadcast %cst_49 : f32 to vector<8x128xf32>
    %202 = arith.subf %201, %193 : vector<8x128xf32>
    %203 = arith.mulf %202, %200 : vector<8x128xf32>
    %204 = arith.mulf %193, %170 : vector<8x128xf32>
    %205 = arith.addf %203, %204 : vector<8x128xf32>
    %206 = arith.addf %205, %25 : vector<8x128xf32>
    %c4 = arith.constant 4 : index
    %c0_50 = arith.constant 0 : index
    %c0_51 = arith.constant 0 : index
    %207 = vector.load %arg8[%c4, %c0_50, %c0_51] : memref<8x8x128xf32, #tpu.memory_space<vmem>>, vector<1x8x128xf32>
    %208 = vector.shape_cast %207 : vector<1x8x128xf32> to vector<8x128xf32>
    %209 = vector.shape_cast %206 : vector<8x128xf32> to vector<1x8x128xf32>
    tpu.vector_store %arg8[%c4, %c0_50, %c0_51], %209 {strides = array<i32>} : memref<8x8x128xf32, #tpu.memory_space<vmem>>, vector<1x8x128xf32>,
    %210 = vector.extract_strided_slice %31 {offsets = [5, 0, 0], sizes = [1, 8, 384], strides = [1, 1, 1]} : vector<8x8x384xf32> to vector<1x8x384xf32>
    %211 = vector.shape_cast %210 : vector<1x8x384xf32> to vector<8x384xf32>
    %cst_52 = arith.constant dense<0.000000e+00> : vector<8x384xf32>
    %212 = tpu.matmul %205, %32, %cst_52 {dimension_numbers = #tpu.dot_dimension_numbers<[1], [0], [0], [1], [0, 0, 1, 1], [], []>} : vector<8x128xf32>, vector<128x384xf32>, vector<8x384xf32> -> vector<8x384xf32>
    %213 = vector.extract_strided_slice %211 {offsets = [0, 0], sizes = [8, 128], strides = [1, 1]} : vector<8x384xf32> to vector<8x128xf32>
    %214 = vector.extract_strided_slice %212 {offsets = [0, 0], sizes = [8, 128], strides = [1, 1]} : vector<8x384xf32> to vector<8x128xf32>
    %215 = arith.addf %213, %214 : vector<8x128xf32>
    %216 = arith.negf %215 : vector<8x128xf32>
    %217 = math.exp %216 : vector<8x128xf32>
    %cst_53 = arith.constant 1.000000e+00 : f32
    %218 = vector.broadcast %cst_53 : f32 to vector<8x128xf32>
    %219 = arith.addf %218, %217 : vector<8x128xf32>
    %220 = arith.divf %218, %219 : vector<8x128xf32>
    %221 = vector.extract_strided_slice %211 {offsets = [0, 128], sizes = [8, 128], strides = [1, 1]} : vector<8x384xf32> to vector<8x128xf32>
    %222 = vector.extract_strided_slice %212 {offsets = [0, 128], sizes = [8, 128], strides = [1, 1]} : vector<8x384xf32> to vector<8x128xf32>
    %223 = arith.addf %221, %222 : vector<8x128xf32>
    %224 = arith.negf %223 : vector<8x128xf32>
    %225 = math.exp %224 : vector<8x128xf32>
    %cst_54 = arith.constant 1.000000e+00 : f32
    %226 = vector.broadcast %cst_54 : f32 to vector<8x128xf32>
    %227 = arith.addf %226, %225 : vector<8x128xf32>
    %228 = arith.divf %226, %227 : vector<8x128xf32>
    %229 = vector.extract_strided_slice %211 {offsets = [0, 256], sizes = [8, 128], strides = [1, 1]} : vector<8x384xf32> to vector<8x128xf32>
    %230 = vector.extract_strided_slice %212 {offsets = [0, 256], sizes = [8, 128], strides = [1, 1]} : vector<8x384xf32> to vector<8x128xf32>
    %231 = vector.broadcast %33 : vector<1x128xf32> to vector<8x128xf32>
    %232 = arith.addf %230, %231 : vector<8x128xf32>
    %233 = arith.mulf %220, %232 : vector<8x128xf32>
    %234 = arith.addf %229, %233 : vector<8x128xf32>
    %235 = math.tanh %234 : vector<8x128xf32>
    %cst_55 = arith.constant 1.000000e+00 : f32
    %236 = vector.broadcast %cst_55 : f32 to vector<8x128xf32>
    %237 = arith.subf %236, %228 : vector<8x128xf32>
    %238 = arith.mulf %237, %235 : vector<8x128xf32>
    %239 = arith.mulf %228, %205 : vector<8x128xf32>
    %240 = arith.addf %238, %239 : vector<8x128xf32>
    %241 = arith.addf %240, %25 : vector<8x128xf32>
    %c5 = arith.constant 5 : index
    %c0_56 = arith.constant 0 : index
    %c0_57 = arith.constant 0 : index
    %242 = vector.load %arg8[%c5, %c0_56, %c0_57] : memref<8x8x128xf32, #tpu.memory_space<vmem>>, vector<1x8x128xf32>
    %243 = vector.shape_cast %242 : vector<1x8x128xf32> to vector<8x128xf32>
    %244 = vector.shape_cast %241 : vector<8x128xf32> to vector<1x8x128xf32>
    tpu.vector_store %arg8[%c5, %c0_56, %c0_57], %244 {strides = array<i32>} : memref<8x8x128xf32, #tpu.memory_space<vmem>>, vector<1x8x128xf32>,
    %245 = vector.extract_strided_slice %31 {offsets = [6, 0, 0], sizes = [1, 8, 384], strides = [1, 1, 1]} : vector<8x8x384xf32> to vector<1x8x384xf32>
    %246 = vector.shape_cast %245 : vector<1x8x384xf32> to vector<8x384xf32>
    %cst_58 = arith.constant dense<0.000000e+00> : vector<8x384xf32>
    %247 = tpu.matmul %240, %32, %cst_58 {dimension_numbers = #tpu.dot_dimension_numbers<[1], [0], [0], [1], [0, 0, 1, 1], [], []>} : vector<8x128xf32>, vector<128x384xf32>, vector<8x384xf32> -> vector<8x384xf32>
    %248 = vector.extract_strided_slice %246 {offsets = [0, 0], sizes = [8, 128], strides = [1, 1]} : vector<8x384xf32> to vector<8x128xf32>
    %249 = vector.extract_strided_slice %247 {offsets = [0, 0], sizes = [8, 128], strides = [1, 1]} : vector<8x384xf32> to vector<8x128xf32>
    %250 = arith.addf %248, %249 : vector<8x128xf32>
    %251 = arith.negf %250 : vector<8x128xf32>
    %252 = math.exp %251 : vector<8x128xf32>
    %cst_59 = arith.constant 1.000000e+00 : f32
    %253 = vector.broadcast %cst_59 : f32 to vector<8x128xf32>
    %254 = arith.addf %253, %252 : vector<8x128xf32>
    %255 = arith.divf %253, %254 : vector<8x128xf32>
    %256 = vector.extract_strided_slice %246 {offsets = [0, 128], sizes = [8, 128], strides = [1, 1]} : vector<8x384xf32> to vector<8x128xf32>
    %257 = vector.extract_strided_slice %247 {offsets = [0, 128], sizes = [8, 128], strides = [1, 1]} : vector<8x384xf32> to vector<8x128xf32>
    %258 = arith.addf %256, %257 : vector<8x128xf32>
    %259 = arith.negf %258 : vector<8x128xf32>
    %260 = math.exp %259 : vector<8x128xf32>
    %cst_60 = arith.constant 1.000000e+00 : f32
    %261 = vector.broadcast %cst_60 : f32 to vector<8x128xf32>
    %262 = arith.addf %261, %260 : vector<8x128xf32>
    %263 = arith.divf %261, %262 : vector<8x128xf32>
    %264 = vector.extract_strided_slice %246 {offsets = [0, 256], sizes = [8, 128], strides = [1, 1]} : vector<8x384xf32> to vector<8x128xf32>
    %265 = vector.extract_strided_slice %247 {offsets = [0, 256], sizes = [8, 128], strides = [1, 1]} : vector<8x384xf32> to vector<8x128xf32>
    %266 = vector.broadcast %33 : vector<1x128xf32> to vector<8x128xf32>
    %267 = arith.addf %265, %266 : vector<8x128xf32>
    %268 = arith.mulf %255, %267 : vector<8x128xf32>
    %269 = arith.addf %264, %268 : vector<8x128xf32>
    %270 = math.tanh %269 : vector<8x128xf32>
    %cst_61 = arith.constant 1.000000e+00 : f32
    %271 = vector.broadcast %cst_61 : f32 to vector<8x128xf32>
    %272 = arith.subf %271, %263 : vector<8x128xf32>
    %273 = arith.mulf %272, %270 : vector<8x128xf32>
    %274 = arith.mulf %263, %240 : vector<8x128xf32>
    %275 = arith.addf %273, %274 : vector<8x128xf32>
    %276 = arith.addf %275, %25 : vector<8x128xf32>
    %c6 = arith.constant 6 : index
    %c0_62 = arith.constant 0 : index
    %c0_63 = arith.constant 0 : index
    %277 = vector.load %arg8[%c6, %c0_62, %c0_63] : memref<8x8x128xf32, #tpu.memory_space<vmem>>, vector<1x8x128xf32>
    %278 = vector.shape_cast %277 : vector<1x8x128xf32> to vector<8x128xf32>
    %279 = vector.shape_cast %276 : vector<8x128xf32> to vector<1x8x128xf32>
    tpu.vector_store %arg8[%c6, %c0_62, %c0_63], %279 {strides = array<i32>} : memref<8x8x128xf32, #tpu.memory_space<vmem>>, vector<1x8x128xf32>,
    %280 = vector.extract_strided_slice %31 {offsets = [7, 0, 0], sizes = [1, 8, 384], strides = [1, 1, 1]} : vector<8x8x384xf32> to vector<1x8x384xf32>
    %281 = vector.shape_cast %280 : vector<1x8x384xf32> to vector<8x384xf32>
    %cst_64 = arith.constant dense<0.000000e+00> : vector<8x384xf32>
    %282 = tpu.matmul %275, %32, %cst_64 {dimension_numbers = #tpu.dot_dimension_numbers<[1], [0], [0], [1], [0, 0, 1, 1], [], []>} : vector<8x128xf32>, vector<128x384xf32>, vector<8x384xf32> -> vector<8x384xf32>
    %283 = vector.extract_strided_slice %281 {offsets = [0, 0], sizes = [8, 128], strides = [1, 1]} : vector<8x384xf32> to vector<8x128xf32>
    %284 = vector.extract_strided_slice %282 {offsets = [0, 0], sizes = [8, 128], strides = [1, 1]} : vector<8x384xf32> to vector<8x128xf32>
    %285 = arith.addf %283, %284 : vector<8x128xf32>
    %286 = arith.negf %285 : vector<8x128xf32>
    %287 = math.exp %286 : vector<8x128xf32>
    %cst_65 = arith.constant 1.000000e+00 : f32
    %288 = vector.broadcast %cst_65 : f32 to vector<8x128xf32>
    %289 = arith.addf %288, %287 : vector<8x128xf32>
    %290 = arith.divf %288, %289 : vector<8x128xf32>
    %291 = vector.extract_strided_slice %281 {offsets = [0, 128], sizes = [8, 128], strides = [1, 1]} : vector<8x384xf32> to vector<8x128xf32>
    %292 = vector.extract_strided_slice %282 {offsets = [0, 128], sizes = [8, 128], strides = [1, 1]} : vector<8x384xf32> to vector<8x128xf32>
    %293 = arith.addf %291, %292 : vector<8x128xf32>
    %294 = arith.negf %293 : vector<8x128xf32>
    %295 = math.exp %294 : vector<8x128xf32>
    %cst_66 = arith.constant 1.000000e+00 : f32
    %296 = vector.broadcast %cst_66 : f32 to vector<8x128xf32>
    %297 = arith.addf %296, %295 : vector<8x128xf32>
    %298 = arith.divf %296, %297 : vector<8x128xf32>
    %299 = vector.extract_strided_slice %281 {offsets = [0, 256], sizes = [8, 128], strides = [1, 1]} : vector<8x384xf32> to vector<8x128xf32>
    %300 = vector.extract_strided_slice %282 {offsets = [0, 256], sizes = [8, 128], strides = [1, 1]} : vector<8x384xf32> to vector<8x128xf32>
    %301 = vector.broadcast %33 : vector<1x128xf32> to vector<8x128xf32>
    %302 = arith.addf %300, %301 : vector<8x128xf32>
    %303 = arith.mulf %290, %302 : vector<8x128xf32>
    %304 = arith.addf %299, %303 : vector<8x128xf32>
    %305 = math.tanh %304 : vector<8x128xf32>
    %cst_67 = arith.constant 1.000000e+00 : f32
    %306 = vector.broadcast %cst_67 : f32 to vector<8x128xf32>
    %307 = arith.subf %306, %298 : vector<8x128xf32>
    %308 = arith.mulf %307, %305 : vector<8x128xf32>
    %309 = arith.mulf %298, %275 : vector<8x128xf32>
    %310 = arith.addf %308, %309 : vector<8x128xf32>
    %311 = arith.addf %310, %25 : vector<8x128xf32>
    %c7 = arith.constant 7 : index
    %c0_68 = arith.constant 0 : index
    %c0_69 = arith.constant 0 : index
    %312 = vector.load %arg8[%c7, %c0_68, %c0_69] : memref<8x8x128xf32, #tpu.memory_space<vmem>>, vector<1x8x128xf32>
    %313 = vector.shape_cast %312 : vector<1x8x128xf32> to vector<8x128xf32>
    %314 = vector.shape_cast %311 : vector<8x128xf32> to vector<1x8x128xf32>
    tpu.vector_store %arg8[%c7, %c0_68, %c0_69], %314 {strides = array<i32>} : memref<8x8x128xf32, #tpu.memory_space<vmem>>, vector<1x8x128xf32>,
    return
  }
}

</mosaic_0001>

<llo_original>
// kernel: tpu_custom_call.1
$region0: #{tpu_custom_call.1}
  #allocation0 [shape = 'u32[]', space=smem, size = 0x4, offset = 0x4, fixed_abs, tag = 'smem constant byte address 0x4 - core index']
  #allocation1 [shape = 'u32[72,128]{1,0:T(1,128)}', space=vmem, size = 0x9000, scoped, tag = 'internal scratch']
  %s0 = inlined_call_operand.vmem [shape: s32[64,1], index: 0, kind: input, shape index: {}]
  %s1 = inlined_call_operand.hbm [shape: f32[128,128], index: 1, kind: input, shape index: {}]
  %s2 = inlined_call_operand.hbm [shape: f32[128,128], index: 2, kind: input, shape index: {}]
  %s3 = inlined_call_operand.vmem [shape: f32[1,128], index: 3, kind: input, shape index: {}]
  %s4 = inlined_call_operand.hbm [shape: f32[128,384], index: 4, kind: input, shape index: {}]
  %s5 = inlined_call_operand.vmem [shape: f32[1,384], index: 5, kind: input, shape index: {}]
  %s6 = inlined_call_operand.hbm [shape: f32[128,384], index: 6, kind: input, shape index: {}]
  %s7 = inlined_call_operand.vmem [shape: f32[1,128], index: 7, kind: input, shape index: {}]
  %s8 = inlined_call_operand.hbm [shape: f32[8,8,128], index: 8, kind: output, shape index: {}]
  %s9 = sld [smem:[#allocation0]]
  $region58: #{tpu_custom_call.1} parent=0
    _
  %s11 = ssub.s32 1, %s9
  %s12 = scalar_select 0, %s11, %s9
  $region1: #{tpu_custom_call.1} parent=0
    #allocation2 [shape = 'u8[65536]{0}', space=vmem, size = 0x10000, scoped, tag = 'input window, operand 1, single buffered']
    #allocation3 [shape = 's32[1]{0}', space=sflag, size = 0x4, scoped, tag = 'scoped memory for tpu_custom_call.1']
    #allocation4 [shape = 's32[1]{0}', space=sflag, size = 0x4, scoped, tag = 'scoped memory for tpu_custom_call.1']
    #allocation5 [shape = 'u8[65536]{0}', space=vmem, size = 0x10000, scoped, tag = 'input window, operand 2, single buffered']
    #allocation6 [shape = 's32[1]{0}', space=sflag, size = 0x4, scoped, tag = 'scoped memory for tpu_custom_call.1']
    #allocation7 [shape = 'u8[196608]{0}', space=vmem, size = 0x30000, scoped, tag = 'input window, operand 4, single buffered']
    #allocation8 [shape = 'u8[196608]{0}', space=vmem, size = 0x30000, scoped, tag = 'input window, operand 6, single buffered']
    #allocation9 [shape = 's32[1]{0}', space=sflag, size = 0x4, scoped, tag = 'scoped memory for tpu_custom_call.1']
    #allocation10 [shape = 'u8[32768]{0}', space=vmem, size = 0x8000, scoped, tag = 'output window, operand 0, single buffered']
    %13 = vsyncpa [#allocation3], 0
    %14 = vsyncpa [#allocation6], 0
    %15 = vsyncpa [#allocation9], 0
    %16 = vsyncpa [#allocation4], 0
    // Predicated region
    $region2: #{tpu_custom_call.1} parent=1 // pred_check
      _
    $region3: #{tpu_custom_call.1} parent=1 // pred_check_branch
      %18 = sbr.rel (0) target = $region5
    $region4: #{tpu_custom_call.1} parent=1 // pred_region
      _
    $region5: #{tpu_custom_call.1} parent=1 // pred_fallthru
      _
    // Predicated region
    $region6: #{tpu_custom_call.1} parent=1 // pred_check
      _
    $region7: #{tpu_custom_call.1} parent=1 // pred_check_branch
      %20 = sbr.rel (0) target = $region9
    $region8: #{tpu_custom_call.1} parent=1 // pred_region
      %22 = vsyncadd [#allocation3], 0
      %s23 = sshll.u32 %s1, 4
      %s24 = int_to_ptr.hbm [resolvable:$true] %s23
      %s25 = sshll.u32 [#allocation2], 4
      %s26 = int_to_ptr.vmem [resolvable:$true] %s25
      %31 = dma.hbm_to_vmem [thread:$0]  %s24, 2048, %s26, [#allocation3], 128, 128, 8
    $region9: #{tpu_custom_call.1} parent=1 // pred_fallthru
      _
    // Predicated region
    $region10: #{tpu_custom_call.1} parent=1 // pred_check
      _
    $region11: #{tpu_custom_call.1} parent=1 // pred_check_branch
      %33 = sbr.rel (0) target = $region13
    $region12: #{tpu_custom_call.1} parent=1 // pred_region
      %35 = vsyncadd [#allocation6], 0
      %s36 = sshll.u32 %s2, 4
      %s37 = int_to_ptr.hbm [resolvable:$true] %s36
      %s38 = sshll.u32 [#allocation5], 4
      %s39 = int_to_ptr.vmem [resolvable:$true] %s38
      %44 = dma.hbm_to_vmem [thread:$0]  %s37, 2048, %s39, [#allocation6], 128, 128, 8
    $region13: #{tpu_custom_call.1} parent=1 // pred_fallthru
      _
    // Predicated region
    $region14: #{tpu_custom_call.1} parent=1 // pred_check
      _
    $region15: #{tpu_custom_call.1} parent=1 // pred_check_branch
      %46 = sbr.rel (0) target = $region17
    $region16: #{tpu_custom_call.1} parent=1 // pred_region
      _
    $region17: #{tpu_custom_call.1} parent=1 // pred_fallthru
      _
    // Predicated region
    $region18: #{tpu_custom_call.1} parent=1 // pred_check
      _
    $region19: #{tpu_custom_call.1} parent=1 // pred_check_branch
      %48 = sbr.rel (0) target = $region21
    $region20: #{tpu_custom_call.1} parent=1 // pred_region
      %50 = vsyncadd [#allocation6], 0
      %s51 = sshll.u32 %s4, 4
      %s52 = int_to_ptr.hbm [resolvable:$true] %s51
      %s53 = sshll.u32 [#allocation7], 4
      %s54 = int_to_ptr.vmem [resolvable:$true] %s53
      %59 = dma.hbm_to_vmem [thread:$0]  %s52, 6144, %s54, [#allocation6], 384, 384, 24
    $region21: #{tpu_custom_call.1} parent=1 // pred_fallthru
      _
    // Predicated region
    $region22: #{tpu_custom_call.1} parent=1 // pred_check
      _
    $region23: #{tpu_custom_call.1} parent=1 // pred_check_branch
      %61 = sbr.rel (0) target = $region25
    $region24: #{tpu_custom_call.1} parent=1 // pred_region
      _
    $region25: #{tpu_custom_call.1} parent=1 // pred_fallthru
      _
    // Predicated region
    $region26: #{tpu_custom_call.1} parent=1 // pred_check
      _
    $region27: #{tpu_custom_call.1} parent=1 // pred_check_branch
      %63 = sbr.rel (0) target = $region29
    $region28: #{tpu_custom_call.1} parent=1 // pred_region
      %65 = vsyncadd [#allocation9], 0
      %s66 = sshll.u32 %s6, 4
      %s67 = int_to_ptr.hbm [resolvable:$true] %s66
      %s68 = sshll.u32 [#allocation8], 4
      %s69 = int_to_ptr.vmem [resolvable:$true] %s68
      %74 = dma.hbm_to_vmem [thread:$0]  %s67, 6144, %s69, [#allocation9], 384, 384, 24
    $region29: #{tpu_custom_call.1} parent=1 // pred_fallthru
      _
    // Predicated region
    $region30: #{tpu_custom_call.1} parent=1 // pred_check
      _
    $region31: #{tpu_custom_call.1} parent=1 // pred_check_branch
      %76 = sbr.rel (0) target = $region33
    $region32: #{tpu_custom_call.1} parent=1 // pred_region
      _
    $region33: #{tpu_custom_call.1} parent=1 // pred_fallthru
      _
    // Predicated region
    $region34: #{tpu_custom_call.1} parent=1 // pred_check
      _
    $region35: #{tpu_custom_call.1} parent=1 // pred_check_branch
      %78 = sbr.rel (0) target = $region37
    $region36: #{tpu_custom_call.1} parent=1 // pred_region
      %80 = dma.done [#allocation3], 2048
    $region37: #{tpu_custom_call.1} parent=1 // pred_fallthru
      _
    // Predicated region
    $region38: #{tpu_custom_call.1} parent=1 // pred_check
      _
    $region39: #{tpu_custom_call.1} parent=1 // pred_check_branch
      %82 = sbr.rel (0) target = $region41
    $region40: #{tpu_custom_call.1} parent=1 // pred_region
      %84 = dma.done [#allocation6], 2048
    $region41: #{tpu_custom_call.1} parent=1 // pred_fallthru
      _
    // Predicated region
    $region42: #{tpu_custom_call.1} parent=1 // pred_check
      _
    $region43: #{tpu_custom_call.1} parent=1 // pred_check_branch
      %86 = sbr.rel (0) target = $region45
    $region44: #{tpu_custom_call.1} parent=1 // pred_region
      %88 = dma.done [#allocation6], 6144
    $region45: #{tpu_custom_call.1} parent=1 // pred_fallthru
      _
    // Predicated region
    $region46: #{tpu_custom_call.1} parent=1 // pred_check
      _
    $region47: #{tpu_custom_call.1} parent=1 // pred_check_branch
      %90 = sbr.rel (0) target = $region49
    $region48: #{tpu_custom_call.1} parent=1 // pred_region
      %92 = dma.done [#allocation9], 6144
    $region49: #{tpu_custom_call.1} parent=1 // pred_fallthru
      _
    %v93 = vld [vmem:[%s0] sm:$0xff]
    %v94 = vld [vmem:[%s0 + $0x8] sm:$0xff]
    %v95 = vld [vmem:[%s0 + $0x10] sm:$0xff]
    %v96 = vld [vmem:[%s0 + $0x18] sm:$0xff]
    %v97 = vld [vmem:[%s0 + $0x20] sm:$0xff]
    %v98 = vld [vmem:[%s0 + $0x28] sm:$0xff]
    %v99 = vld [vmem:[%s0 + $0x30] sm:$0xff]
    %v100 = vld [vmem:[%s0 + $0x38] sm:$0xff]
    %v101 = vlaneseq
    %v102 = vand.u32 %v101, 127
    %103 = vset.pattern.permute.xlu0 0
    %104 = vperm.xlu0 %103, %v93
    %v105 = vpop.permute.xlu0 %104
    %106 = vset.pattern.permute.xlu0 0
    %107 = vperm.xlu0 %106, %v94
    %v108 = vpop.permute.xlu0 %107
    %109 = vset.pattern.permute.xlu0 0
    %110 = vperm.xlu0 %109, %v95
    %v111 = vpop.permute.xlu0 %110
    %112 = vset.pattern.permute.xlu0 0
    %113 = vperm.xlu0 %112, %v96
    %v114 = vpop.permute.xlu0 %113
    %115 = vset.pattern.permute.xlu0 0
    %116 = vperm.xlu0 %115, %v97
    %v117 = vpop.permute.xlu0 %116
    %118 = vset.pattern.permute.xlu0 0
    %119 = vperm.xlu0 %118, %v98
    %v120 = vpop.permute.xlu0 %119
    %121 = vset.pattern.permute.xlu0 0
    %122 = vperm.xlu0 %121, %v99
    %v123 = vpop.permute.xlu0 %122
    %124 = vset.pattern.permute.xlu0 0
    %125 = vperm.xlu0 %124, %v100
    %v126 = vpop.permute.xlu0 %125
    %vm127 = vcmp.eq.s32.totalorder %v105, %v102
    %vm128 = vcmp.eq.s32.totalorder %v108, %v102
    %vm129 = vcmp.eq.s32.totalorder %v111, %v102
    %vm130 = vcmp.eq.s32.totalorder %v114, %v102
    %vm131 = vcmp.eq.s32.totalorder %v117, %v102
    %vm132 = vcmp.eq.s32.totalorder %v120, %v102
    %vm133 = vcmp.eq.s32.totalorder %v123, %v102
    %vm134 = vcmp.eq.s32.totalorder %v126, %v102
    %v135 = vsel %vm127, 1, 0
    %v136 = vsel %vm128, 1, 0
    %v137 = vsel %vm129, 1, 0
    %v138 = vsel %vm130, 1, 0
    %v139 = vsel %vm131, 1, 0
    %v140 = vsel %vm132, 1, 0
    %v141 = vsel %vm133, 1, 0
    %v142 = vsel %vm134, 1, 0
    %v143 = vcvt.s32.f32 %v135
    %v144 = vcvt.s32.f32 %v136
    %v145 = vcvt.s32.f32 %v137
    %v146 = vcvt.s32.f32 %v138
    %v147 = vcvt.s32.f32 %v139
    %v148 = vcvt.s32.f32 %v140
    %v149 = vcvt.s32.f32 %v141
    %v150 = vcvt.s32.f32 %v142
    %v151 = vld [vmem:[#allocation2] sm:$0xff]
    %v152 = vld [vmem:[#allocation2 + $0x8] sm:$0xff]
    %v153 = vld [vmem:[#allocation2 + $0x10] sm:$0xff]
    %v154 = vld [vmem:[#allocation2 + $0x18] sm:$0xff]
    %v155 = vld [vmem:[#allocation2 + $0x20] sm:$0xff]
    %v156 = vld [vmem:[#allocation2 + $0x28] sm:$0xff]
    %v157 = vld [vmem:[#allocation2 + $0x30] sm:$0xff]
    %v158 = vld [vmem:[#allocation2 + $0x38] sm:$0xff]
    %v159 = vld [vmem:[#allocation2 + $0x40] sm:$0xff]
    %v160 = vld [vmem:[#allocation2 + $0x48] sm:$0xff]
    %v161 = vld [vmem:[#allocation2 + $0x50] sm:$0xff]
    %v162 = vld [vmem:[#allocation2 + $0x58] sm:$0xff]
    %v163 = vld [vmem:[#allocation2 + $0x60] sm:$0xff]
    %v164 = vld [vmem:[#allocation2 + $0x68] sm:$0xff]
    %v165 = vld [vmem:[#allocation2 + $0x70] sm:$0xff]
    %v166 = vld [vmem:[#allocation2 + $0x78] sm:$0xff]
    %167 = vmatpush.msra.mxu0 %v166
    %168 = vmatpush.msra.mxu0 %v165
    %169 = vmatpush.msra.mxu0 %v164
    %170 = vmatpush.msra.mxu0 %v163
    %171 = vmatpush.msra.mxu0 %v162
    %172 = vmatpush.msra.mxu0 %v161
    %173 = vmatpush.msra.mxu0 %v160
    %174 = vmatpush.msra.mxu0 %v159
    %175 = vmatpush.msra.mxu0 %v158
    %176 = vmatpush.msra.mxu0 %v157
    %177 = vmatpush.msra.mxu0 %v156
    %178 = vmatpush.msra.mxu0 %v155
    %179 = vmatpush.msra.mxu0 %v154
    %180 = vmatpush.msra.mxu0 %v153
    %181 = vmatpush.msra.mxu0 %v152
    %182 = vmatpush.msra.mxu0 %v151
    %183 = vmatmul.f32.gmra.mxu0 %v143
    %v184 = vpop.f32.mrf.mxu0
    %v185 = vadd.f32 0.0, %v184
    %186 = vmatmul.f32.gmra.mxu0 %v144
    %v187 = vpop.f32.mrf.mxu0
    %v188 = vadd.f32 0.0, %v187
    %189 = vmatmul.f32.gmra.mxu0 %v145
    %v190 = vpop.f32.mrf.mxu0
    %v191 = vadd.f32 0.0, %v190
    %192 = vmatmul.f32.gmra.mxu0 %v146
    %v193 = vpop.f32.mrf.mxu0
    %v194 = vadd.f32 0.0, %v193
    %195 = vmatmul.f32.gmra.mxu0 %v147
    %v196 = vpop.f32.mrf.mxu0
    %v197 = vadd.f32 0.0, %v196
    %198 = vmatmul.f32.gmra.mxu0 %v148
    %v199 = vpop.f32.mrf.mxu0
    %v200 = vadd.f32 0.0, %v199
    %201 = vmatmul.f32.gmra.mxu0 %v149
    %v202 = vpop.f32.mrf.mxu0
    %203 = vmatmul.f32.gmra.mxu0 %v150
    %v204 = vpop.f32.mrf.mxu0
    %205 = vdwg.mxu0
    %v206 = vld [vmem:[#allocation5] sm:$0xff]
    %v207 = vld [vmem:[#allocation5 + $0x8] sm:$0xff]
    %v208 = vld [vmem:[#allocation5 + $0x10] sm:$0xff]
    %v209 = vld [vmem:[#allocation5 + $0x18] sm:$0xff]
    %v210 = vld [vmem:[#allocation5 + $0x20] sm:$0xff]
    %v211 = vld [vmem:[#allocation5 + $0x28] sm:$0xff]
    %v212 = vld [vmem:[#allocation5 + $0x30] sm:$0xff]
    %v213 = vld [vmem:[#allocation5 + $0x38] sm:$0xff]
    %v214 = vld [vmem:[#allocation5 + $0x40] sm:$0xff]
    %v215 = vld [vmem:[#allocation5 + $0x48] sm:$0xff]
    %v216 = vld [vmem:[#allocation5 + $0x50] sm:$0xff]
    %v217 = vld [vmem:[#allocation5 + $0x58] sm:$0xff]
    %v218 = vld [vmem:[#allocation5 + $0x60] sm:$0xff]
    %v219 = vld [vmem:[#allocation5 + $0x68] sm:$0xff]
    %v220 = vld [vmem:[#allocation5 + $0x70] sm:$0xff]
    %v221 = vld [vmem:[#allocation5 + $0x78] sm:$0xff]
    %222 = vmatpush.msra.mxu0 %v221
    %223 = vmatpush.msra.mxu0 %v220
    %224 = vmatpush.msra.mxu0 %v219
    %225 = vmatpush.msra.mxu0 %v218
    %226 = vmatpush.msra.mxu0 %v217
    %227 = vmatpush.msra.mxu0 %v216
    %228 = vmatpush.msra.mxu0 %v215
    %229 = vmatpush.msra.mxu0 %v214
    %230 = vmatpush.msra.mxu0 %v213
    %231 = vmatpush.msra.mxu0 %v212
    %232 = vmatpush.msra.mxu0 %v211
    %233 = vmatpush.msra.mxu0 %v210
    %234 = vmatpush.msra.mxu0 %v209
    %235 = vmatpush.msra.mxu0 %v208
    %236 = vmatpush.msra.mxu0 %v207
    %237 = vmatpush.msra.mxu0 %v206
    %238 = vmatmul.f32.gmra.mxu0 %v143
    %v239 = vpop.f32.mrf.mxu0
    %240 = vmatmul.f32.gmra.mxu0 %v144
    %v241 = vpop.f32.mrf.mxu0
    %v242 = vadd.f32 0.0, %v241
    %243 = vmatmul.f32.gmra.mxu0 %v145
    %v244 = vpop.f32.mrf.mxu0
    %v245 = vadd.f32 0.0, %v244
    %246 = vmatmul.f32.gmra.mxu0 %v146
    %v247 = vpop.f32.mrf.mxu0
    %v248 = vadd.f32 0.0, %v247
    %249 = vmatmul.f32.gmra.mxu0 %v147
    %v250 = vpop.f32.mrf.mxu0
    %v251 = vadd.f32 0.0, %v250
    %252 = vmatmul.f32.gmra.mxu0 %v148
    %v253 = vpop.f32.mrf.mxu0
    %v254 = vadd.f32 0.0, %v253
    %255 = vmatmul.f32.gmra.mxu0 %v149
    %v256 = vpop.f32.mrf.mxu0
    %v257 = vadd.f32 0.0, %v256
    %258 = vmatmul.f32.gmra.mxu0 %v150
    %v259 = vpop.f32.mrf.mxu0
    %260 = vdwg.mxu0
    %v261 = vadd.f32 %v185, %v242
    %v262 = vadd.f32 %v188, %v245
    %v263 = vadd.f32 %v191, %v248
    %v264 = vadd.f32 %v194, %v251
    %v265 = vadd.f32 %v197, %v254
    %v266 = vadd.f32 %v200, %v257
    %v267 = vld [vmem:[%s3] sm:$0x1]
    %v269 = vperm.slane %v267, 0
    %v271 = vadd.f32 %v261, %v269
    %v272 = vadd.f32 %v262, %v269
    %v273 = vadd.f32 %v263, %v269
    %v274 = vadd.f32 %v264, %v269
    %v275 = vadd.f32 %v265, %v269
    %v276 = vadd.f32 %v266, %v269
    %v277 = vadd.f32 %v271, %v272
    %v278 = vadd.f32 %v273, %v274
    %v279 = vadd.f32 %v275, %v276
    %v280 = vrcp.pop 2.0
    %v281 = vmul.f32 2.0, %v280
    %v282 = vsub.f32 1.0, %v281
    %v283 = vmul.f32 %v280, %v282
    %v284 = vadd.f32 %v280, %v283
    %vm285 = vweird.f32 %v280
    %v286 = vsel %vm285, %v280, %v284
    %v287 = vmul.f32 %v277, %v286
    %v288 = vmul.f32 %v278, %v286
    %v289 = vmul.f32 %v279, %v286
    %v290 = vtanh.pop %v287
    %v291 = vtanh.pop %v288
    %v292 = vtanh.pop %v289
    %v293 = vadd.f32 %v290, %v291
    %v294 = vadd.f32 %v293, %v292
    %v295 = vld [vmem:[#allocation7] sm:$0xff]
    %v296 = vld [vmem:[#allocation7 + $0x8] sm:$0xff]
    %v297 = vld [vmem:[#allocation7 + $0x10] sm:$0xff]
    %v298 = vld [vmem:[#allocation7 + $0x18] sm:$0xff]
    %v299 = vld [vmem:[#allocation7 + $0x20] sm:$0xff]
    %v300 = vld [vmem:[#allocation7 + $0x28] sm:$0xff]
    %v301 = vld [vmem:[#allocation7 + $0x30] sm:$0xff]
    %v302 = vld [vmem:[#allocation7 + $0x38] sm:$0xff]
    %v303 = vld [vmem:[#allocation7 + $0x40] sm:$0xff]
    %v304 = vld [vmem:[#allocation7 + $0x48] sm:$0xff]
    %v305 = vld [vmem:[#allocation7 + $0x50] sm:$0xff]
    %v306 = vld [vmem:[#allocation7 + $0x58] sm:$0xff]
    %v307 = vld [vmem:[#allocation7 + $0x60] sm:$0xff]
    %v308 = vld [vmem:[#allocation7 + $0x68] sm:$0xff]
    %v309 = vld [vmem:[#allocation7 + $0x70] sm:$0xff]
    %v310 = vld [vmem:[#allocation7 + $0x78] sm:$0xff]
    %v311 = vld [vmem:[#allocation7 + $0x80] sm:$0xff]
    %v312 = vld [vmem:[#allocation7 + $0x88] sm:$0xff]
    %v313 = vld [vmem:[#allocation7 + $0x90] sm:$0xff]
    %v314 = vld [vmem:[#allocation7 + $0x98] sm:$0xff]
    %v315 = vld [vmem:[#allocation7 + $0xa0] sm:$0xff]
    %v316 = vld [vmem:[#allocation7 + $0xa8] sm:$0xff]
    %v317 = vld [vmem:[#allocation7 + $0xb0] sm:$0xff]
    %v318 = vld [vmem:[#allocation7 + $0xb8] sm:$0xff]
    %v319 = vld [vmem:[#allocation7 + $0xc0] sm:$0xff]
    %v320 = vld [vmem:[#allocation7 + $0xc8] sm:$0xff]
    %v321 = vld [vmem:[#allocation7 + $0xd0] sm:$0xff]
    %v322 = vld [vmem:[#allocation7 + $0xd8] sm:$0xff]
    %v323 = vld [vmem:[#allocation7 + $0xe0] sm:$0xff]
    %v324 = vld [vmem:[#allocation7 + $0xe8] sm:$0xff]
    %v325 = vld [vmem:[#allocation7 + $0xf0] sm:$0xff]
    %v326 = vld [vmem:[#allocation7 + $0xf8] sm:$0xff]
    %v327 = vld [vmem:[#allocation7 + $0x100] sm:$0xff]
    %v328 = vld [vmem:[#allocation7 + $0x108] sm:$0xff]
    %v329 = vld [vmem:[#allocation7 + $0x110] sm:$0xff]
    %v330 = vld [vmem:[#allocation7 + $0x118] sm:$0xff]
    %v331 = vld [vmem:[#allocation7 + $0x120] sm:$0xff]
    %v332 = vld [vmem:[#allocation7 + $0x128] sm:$0xff]
    %v333 = vld [vmem:[#allocation7 + $0x130] sm:$0xff]
    %v334 = vld [vmem:[#allocation7 + $0x138] sm:$0xff]
    %v335 = vld [vmem:[#allocation7 + $0x140] sm:$0xff]
    %v336 = vld [vmem:[#allocation7 + $0x148] sm:$0xff]
    %v337 = vld [vmem:[#allocation7 + $0x150] sm:$0xff]
    %v338 = vld [vmem:[#allocation7 + $0x158] sm:$0xff]
    %v339 = vld [vmem:[#allocation7 + $0x160] sm:$0xff]
    %v340 = vld [vmem:[#allocation7 + $0x168] sm:$0xff]
    %v341 = vld [vmem:[#allocation7 + $0x170] sm:$0xff]
    %v342 = vld [vmem:[#allocation7 + $0x178] sm:$0xff]
    %v343 = vld [vmem:[%s5] sm:$0x7]
    %v345 = vperm.slane %v343, 0
    %v346 = vperm.slane %v343, 1
    %v347 = vperm.slane %v343, 2
    %351 = vmatpush.msra.mxu0 %v340
    %352 = vmatpush.msra.mxu0 %v337
    %353 = vmatpush.msra.mxu0 %v334
    %354 = vmatpush.msra.mxu0 %v331
    %355 = vmatpush.msra.mxu0 %v328
    %356 = vmatpush.msra.mxu0 %v325
    %357 = vmatpush.msra.mxu0 %v322
    %358 = vmatpush.msra.mxu0 %v319
    %359 = vmatpush.msra.mxu0 %v316
    %360 = vmatpush.msra.mxu0 %v313
    %361 = vmatpush.msra.mxu0 %v310
    %362 = vmatpush.msra.mxu0 %v307
    %363 = vmatpush.msra.mxu0 %v304
    %364 = vmatpush.msra.mxu0 %v301
    %365 = vmatpush.msra.mxu0 %v298
    %366 = vmatpush.msra.mxu0 %v295
    %367 = vmatmul.f32.gmra.mxu0 %v143
    %v368 = vpop.f32.mrf.mxu0
    %v369 = vadd.f32 %v345, %v368
    %370 = vmatmul.f32.gmra.mxu0 %v144
    %v371 = vpop.f32.mrf.mxu0
    %v372 = vadd.f32 %v345, %v371
    %373 = vmatmul.f32.gmra.mxu0 %v145
    %v374 = vpop.f32.mrf.mxu0
    %v375 = vadd.f32 %v345, %v374
    %376 = vmatmul.f32.gmra.mxu0 %v146
    %v377 = vpop.f32.mrf.mxu0
    %v378 = vadd.f32 %v345, %v377
    %379 = vmatmul.f32.gmra.mxu0 %v147
    %v380 = vpop.f32.mrf.mxu0
    %v381 = vadd.f32 %v345, %v380
    %382 = vmatmul.f32.gmra.mxu0 %v148
    %v383 = vpop.f32.mrf.mxu0
    %v384 = vadd.f32 %v345, %v383
    %385 = vmatmul.f32.gmra.mxu0 %v149
    %v386 = vpop.f32.mrf.mxu0
    %v387 = vadd.f32 %v345, %v386
    %388 = vmatmul.f32.gmra.mxu0 %v150
    %v389 = vpop.f32.mrf.mxu0
    %v390 = vadd.f32 %v345, %v389
    %391 = vdwg.mxu0
    %392 = vmatpush.msra.mxu0 %v341
    %393 = vmatpush.msra.mxu0 %v338
    %394 = vmatpush.msra.mxu0 %v335
    %395 = vmatpush.msra.mxu0 %v332
    %396 = vmatpush.msra.mxu0 %v329
    %397 = vmatpush.msra.mxu0 %v326
    %398 = vmatpush.msra.mxu0 %v323
    %399 = vmatpush.msra.mxu0 %v320
    %400 = vmatpush.msra.mxu0 %v317
    %401 = vmatpush.msra.mxu0 %v314
    %402 = vmatpush.msra.mxu0 %v311
    %403 = vmatpush.msra.mxu0 %v308
    %404 = vmatpush.msra.mxu0 %v305
    %405 = vmatpush.msra.mxu0 %v302
    %406 = vmatpush.msra.mxu0 %v299
    %407 = vmatpush.msra.mxu0 %v296
    %408 = vmatmul.f32.gmra.mxu0 %v143
    %v409 = vpop.f32.mrf.mxu0
    %v410 = vadd.f32 %v346, %v409
    %411 = vmatmul.f32.gmra.mxu0 %v144
    %v412 = vpop.f32.mrf.mxu0
    %v413 = vadd.f32 %v346, %v412
    %414 = vmatmul.f32.gmra.mxu0 %v145
    %v415 = vpop.f32.mrf.mxu0
    %v416 = vadd.f32 %v346, %v415
    %417 = vmatmul.f32.gmra.mxu0 %v146
    %v418 = vpop.f32.mrf.mxu0
    %v419 = vadd.f32 %v346, %v418
    %420 = vmatmul.f32.gmra.mxu0 %v147
    %v421 = vpop.f32.mrf.mxu0
    %v422 = vadd.f32 %v346, %v421
    %423 = vmatmul.f32.gmra.mxu0 %v148
    %v424 = vpop.f32.mrf.mxu0
    %v425 = vadd.f32 %v346, %v424
    %426 = vmatmul.f32.gmra.mxu0 %v149
    %v427 = vpop.f32.mrf.mxu0
    %v428 = vadd.f32 %v346, %v427
    %429 = vmatmul.f32.gmra.mxu0 %v150
    %v430 = vpop.f32.mrf.mxu0
    %v431 = vadd.f32 %v346, %v430
    %432 = vdwg.mxu0
    %433 = vmatpush.msra.mxu0 %v342
    %434 = vmatpush.msra.mxu0 %v339
    %435 = vmatpush.msra.mxu0 %v336
    %436 = vmatpush.msra.mxu0 %v333
    %437 = vmatpush.msra.mxu0 %v330
    %438 = vmatpush.msra.mxu0 %v327
    %439 = vmatpush.msra.mxu0 %v324
    %440 = vmatpush.msra.mxu0 %v321
    %441 = vmatpush.msra.mxu0 %v318
    %442 = vmatpush.msra.mxu0 %v315
    %443 = vmatpush.msra.mxu0 %v312
    %444 = vmatpush.msra.mxu0 %v309
    %445 = vmatpush.msra.mxu0 %v306
    %446 = vmatpush.msra.mxu0 %v303
    %447 = vmatpush.msra.mxu0 %v300
    %448 = vmatpush.msra.mxu0 %v297
    %449 = vmatmul.f32.gmra.mxu0 %v143
    %v450 = vpop.f32.mrf.mxu0
    %v451 = vadd.f32 %v347, %v450
    %452 = vmatmul.f32.gmra.mxu0 %v144
    %v453 = vpop.f32.mrf.mxu0
    %v454 = vadd.f32 %v347, %v453
    %455 = vmatmul.f32.gmra.mxu0 %v145
    %v456 = vpop.f32.mrf.mxu0
    %v457 = vadd.f32 %v347, %v456
    %458 = vmatmul.f32.gmra.mxu0 %v146
    %v459 = vpop.f32.mrf.mxu0
    %v460 = vadd.f32 %v347, %v459
    %461 = vmatmul.f32.gmra.mxu0 %v147
    %v462 = vpop.f32.mrf.mxu0
    %v463 = vadd.f32 %v347, %v462
    %464 = vmatmul.f32.gmra.mxu0 %v148
    %v465 = vpop.f32.mrf.mxu0
    %v466 = vadd.f32 %v347, %v465
    %467 = vmatmul.f32.gmra.mxu0 %v149
    %v468 = vpop.f32.mrf.mxu0
    %v469 = vadd.f32 %v347, %v468
    %470 = vmatmul.f32.gmra.mxu0 %v150
    %v471 = vpop.f32.mrf.mxu0
    %v472 = vadd.f32 %v347, %v471
    %473 = vdwg.mxu0
    %v474 = vld [vmem:[#allocation8] sm:$0xff]
    %v475 = vld [vmem:[#allocation8 + $0x8] sm:$0xff]
    %v476 = vld [vmem:[#allocation8 + $0x10] sm:$0xff]
    %v477 = vld [vmem:[#allocation8 + $0x18] sm:$0xff]
    %v478 = vld [vmem:[#allocation8 + $0x20] sm:$0xff]
    %v479 = vld [vmem:[#allocation8 + $0x28] sm:$0xff]
    %v480 = vld [vmem:[#allocation8 + $0x30] sm:$0xff]
    %v481 = vld [vmem:[#allocation8 + $0x38] sm:$0xff]
    %v482 = vld [vmem:[#allocation8 + $0x40] sm:$0xff]
    %v483 = vld [vmem:[#allocation8 + $0x48] sm:$0xff]
    %v484 = vld [vmem:[#allocation8 + $0x50] sm:$0xff]
    %v485 = vld [vmem:[#allocation8 + $0x58] sm:$0xff]
    %v486 = vld [vmem:[#allocation8 + $0x60] sm:$0xff]
    %v487 = vld [vmem:[#allocation8 + $0x68] sm:$0xff]
    %v488 = vld [vmem:[#allocation8 + $0x70] sm:$0xff]
    %v489 = vld [vmem:[#allocation8 + $0x78] sm:$0xff]
    %v490 = vld [vmem:[#allocation8 + $0x80] sm:$0xff]
    %v491 = vld [vmem:[#allocation8 + $0x88] sm:$0xff]
    %v492 = vld [vmem:[#allocation8 + $0x90] sm:$0xff]
    %v493 = vld [vmem:[#allocation8 + $0x98] sm:$0xff]
    %v494 = vld [vmem:[#allocation8 + $0xa0] sm:$0xff]
    %v495 = vld [vmem:[#allocation8 + $0xa8] sm:$0xff]
    %v496 = vld [vmem:[#allocation8 + $0xb0] sm:$0xff]
    %v497 = vld [vmem:[#allocation8 + $0xb8] sm:$0xff]
    %v498 = vld [vmem:[#allocation8 + $0xc0] sm:$0xff]
    %v499 = vld [vmem:[#allocation8 + $0xc8] sm:$0xff]
    %v500 = vld [vmem:[#allocation8 + $0xd0] sm:$0xff]
    %v501 = vld [vmem:[#allocation8 + $0xd8] sm:$0xff]
    %v502 = vld [vmem:[#allocation8 + $0xe0] sm:$0xff]
    %v503 = vld [vmem:[#allocation8 + $0xe8] sm:$0xff]
    %v504 = vld [vmem:[#allocation8 + $0xf0] sm:$0xff]
    %v505 = vld [vmem:[#allocation8 + $0xf8] sm:$0xff]
    %v506 = vld [vmem:[#allocation8 + $0x100] sm:$0xff]
    %v507 = vld [vmem:[#allocation8 + $0x108] sm:$0xff]
    %v508 = vld [vmem:[#allocation8 + $0x110] sm:$0xff]
    %v509 = vld [vmem:[#allocation8 + $0x118] sm:$0xff]
    %v510 = vld [vmem:[#allocation8 + $0x120] sm:$0xff]
    %v511 = vld [vmem:[#allocation8 + $0x128] sm:$0xff]
    %v512 = vld [vmem:[#allocation8 + $0x130] sm:$0xff]
    %v513 = vld [vmem:[#allocation8 + $0x138] sm:$0xff]
    %v514 = vld [vmem:[#allocation8 + $0x140] sm:$0xff]
    %v515 = vld [vmem:[#allocation8 + $0x148] sm:$0xff]
    %v516 = vld [vmem:[#allocation8 + $0x150] sm:$0xff]
    %v517 = vld [vmem:[#allocation8 + $0x158] sm:$0xff]
    %v518 = vld [vmem:[#allocation8 + $0x160] sm:$0xff]
    %v519 = vld [vmem:[#allocation8 + $0x168] sm:$0xff]
    %v520 = vld [vmem:[#allocation8 + $0x170] sm:$0xff]
    %v521 = vld [vmem:[#allocation8 + $0x178] sm:$0xff]
    %v522 = vld [vmem:[%s7] sm:$0x1]
    %523 = vmatpush.msra.mxu0 %v519
    %524 = vmatpush.msra.mxu0 %v516
    %525 = vmatpush.msra.mxu0 %v513
    %526 = vmatpush.msra.mxu0 %v510
    %527 = vmatpush.msra.mxu0 %v507
    %528 = vmatpush.msra.mxu0 %v504
    %529 = vmatpush.msra.mxu0 %v501
    %530 = vmatpush.msra.mxu0 %v498
    %531 = vmatpush.msra.mxu0 %v495
    %532 = vmatpush.msra.mxu0 %v492
    %533 = vmatpush.msra.mxu0 %v489
    %534 = vmatpush.msra.mxu0 %v486
    %535 = vmatpush.msra.mxu0 %v483
    %536 = vmatpush.msra.mxu0 %v480
    %537 = vmatpush.msra.mxu0 %v477
    %538 = vmatpush.msra.mxu0 %v474
    %539 = vmatmul.f32.gmra.mxu0 0.0
    %v540 = vpop.f32.mrf.mxu0
    %v541 = vadd.f32 0.0, %v540
    %542 = vdwg.mxu0
    %543 = vmatpush.msra.mxu0 %v520
    %544 = vmatpush.msra.mxu0 %v517
    %545 = vmatpush.msra.mxu0 %v514
    %546 = vmatpush.msra.mxu0 %v511
    %547 = vmatpush.msra.mxu0 %v508
    %548 = vmatpush.msra.mxu0 %v505
    %549 = vmatpush.msra.mxu0 %v502
    %550 = vmatpush.msra.mxu0 %v499
    %551 = vmatpush.msra.mxu0 %v496
    %552 = vmatpush.msra.mxu0 %v493
    %553 = vmatpush.msra.mxu0 %v490
    %554 = vmatpush.msra.mxu0 %v487
    %555 = vmatpush.msra.mxu0 %v484
    %556 = vmatpush.msra.mxu0 %v481
    %557 = vmatpush.msra.mxu0 %v478
    %558 = vmatpush.msra.mxu0 %v475
    %559 = vmatmul.f32.gmra.mxu0 0.0
    %v560 = vpop.f32.mrf.mxu0
    %v561 = vadd.f32 0.0, %v560
    %562 = vdwg.mxu0
    %563 = vmatpush.msra.mxu0 %v521
    %564 = vmatpush.msra.mxu0 %v518
    %565 = vmatpush.msra.mxu0 %v515
    %566 = vmatpush.msra.mxu0 %v512
    %567 = vmatpush.msra.mxu0 %v509
    %568 = vmatpush.msra.mxu0 %v506
    %569 = vmatpush.msra.mxu0 %v503
    %570 = vmatpush.msra.mxu0 %v500
    %571 = vmatpush.msra.mxu0 %v497
    %572 = vmatpush.msra.mxu0 %v494
    %573 = vmatpush.msra.mxu0 %v491
    %574 = vmatpush.msra.mxu0 %v488
    %575 = vmatpush.msra.mxu0 %v485
    %576 = vmatpush.msra.mxu0 %v482
    %577 = vmatpush.msra.mxu0 %v479
    %578 = vmatpush.msra.mxu0 %v476
    %579 = vmatmul.f32.gmra.mxu0 0.0
    %v580 = vpop.f32.mrf.mxu0
    %v581 = vadd.f32 0.0, %v580
    %582 = vdwg.mxu0
    %v583 = vadd.f32 %v369, %v541
    %v584 = vxor.u32 %v583, 2147483648
    %v585 = vmul.f32 %v584, 1.442695
    %v586 = vpow.pop %v585
    %v587 = vadd.f32 %v586, 1.0
    %v588 = vrcp.pop %v587
    %v589 = vmul.f32 %v587, %v588
    %v590 = vsub.f32 1.0, %v589
    %v591 = vmul.f32 %v588, %v590
    %v592 = vadd.f32 %v588, %v591
    %vm593 = vweird.f32 %v587
    %vm594 = vweird.f32 %v588
    %vm595 = vmor %vm593, %vm594
    %v596 = vsel %vm595, %v588, %v592
    %v597 = vand.u32 2147483647, %v587
    %vm598 = vcmp.eq.f32.partialorder %v597, 8.507059e+37
    %v599 = vand.u32 %v587, 2147483648
    %v600 = vor.u32 1.1754944e-38, %v599
    %v601 = vsel %vm598, %v600, %v596
    %v602 = vmul.f32 1.0, %v601
    %v603 = vadd.f32 %v410, %v561
    %v604 = vxor.u32 %v603, 2147483648
    %v605 = vmul.f32 %v604, 1.442695
    %v606 = vpow.pop %v605
    %v607 = vadd.f32 %v606, 1.0
    %v608 = vrcp.pop %v607
    %v609 = vmul.f32 %v607, %v608
    %v610 = vsub.f32 1.0, %v609
    %v611 = vmul.f32 %v608, %v610
    %v612 = vadd.f32 %v608, %v611
    %vm613 = vweird.f32 %v607
    %vm614 = vweird.f32 %v608
    %vm615 = vmor %vm613, %vm614
    %v616 = vsel %vm615, %v608, %v612
    %v617 = vand.u32 2147483647, %v607
    %vm618 = vcmp.eq.f32.partialorder %v617, 8.507059e+37
    %v619 = vand.u32 %v607, 2147483648
    %v620 = vor.u32 1.1754944e-38, %v619
    %v621 = vsel %vm618, %v620, %v616
    %v622 = vmul.f32 1.0, %v621
    %v624 = vperm.slane %v522, 0
    %v626 = vadd.f32 %v581, %v624
    %v627 = vmul.f32 %v602, %v626
    %v628 = vadd.f32 %v451, %v627
    %v629 = vtanh.pop %v628
    %v630 = vsub.f32 1.0, %v622
    %v631 = vmul.f32 %v630, %v629
    %v632 = vmul.f32 %v622, 0.0
    %v633 = vadd.f32 %v631, %v632
    %v634 = vadd.f32 %v633, %v294
    %635 = vst [vmem:[#allocation10] sm:$0xff] %v634
    %636 = vmatpush.msra.mxu0 %v519
    %637 = vmatpush.msra.mxu0 %v516
    %638 = vmatpush.msra.mxu0 %v513
    %639 = vmatpush.msra.mxu0 %v510
    %640 = vmatpush.msra.mxu0 %v507
    %641 = vmatpush.msra.mxu0 %v504
    %642 = vmatpush.msra.mxu0 %v501
    %643 = vmatpush.msra.mxu0 %v498
    %644 = vmatpush.msra.mxu0 %v495
    %645 = vmatpush.msra.mxu0 %v492
    %646 = vmatpush.msra.mxu0 %v489
    %647 = vmatpush.msra.mxu0 %v486
    %648 = vmatpush.msra.mxu0 %v483
    %649 = vmatpush.msra.mxu0 %v480
    %650 = vmatpush.msra.mxu0 %v477
    %651 = vmatpush.msra.mxu0 %v474
    %652 = vmatmul.f32.gmra.mxu0 %v633
    %v653 = vpop.f32.mrf.mxu0
    %v654 = vadd.f32 0.0, %v653
    %655 = vdwg.mxu0
    %656 = vmatpush.msra.mxu0 %v520
    %657 = vmatpush.msra.mxu0 %v517
    %658 = vmatpush.msra.mxu0 %v514
    %659 = vmatpush.msra.mxu0 %v511
    %660 = vmatpush.msra.mxu0 %v508
    %661 = vmatpush.msra.mxu0 %v505
    %662 = vmatpush.msra.mxu0 %v502
    %663 = vmatpush.msra.mxu0 %v499
    %664 = vmatpush.msra.mxu0 %v496
    %665 = vmatpush.msra.mxu0 %v493
    %666 = vmatpush.msra.mxu0 %v490
    %667 = vmatpush.msra.mxu0 %v487
    %668 = vmatpush.msra.mxu0 %v484
    %669 = vmatpush.msra.mxu0 %v481
    %670 = vmatpush.msra.mxu0 %v478
    %671 = vmatpush.msra.mxu0 %v475
    %672 = vmatmul.f32.gmra.mxu0 %v633
    %v673 = vpop.f32.mrf.mxu0
    %v674 = vadd.f32 0.0, %v673
    %675 = vdwg.mxu0
    %676 = vmatpush.msra.mxu0 %v521
    %677 = vmatpush.msra.mxu0 %v518
    %678 = vmatpush.msra.mxu0 %v515
    %679 = vmatpush.msra.mxu0 %v512
    %680 = vmatpush.msra.mxu0 %v509
    %681 = vmatpush.msra.mxu0 %v506
    %682 = vmatpush.msra.mxu0 %v503
    %683 = vmatpush.msra.mxu0 %v500
    %684 = vmatpush.msra.mxu0 %v497
    %685 = vmatpush.msra.mxu0 %v494
    %686 = vmatpush.msra.mxu0 %v491
    %687 = vmatpush.msra.mxu0 %v488
    %688 = vmatpush.msra.mxu0 %v485
    %689 = vmatpush.msra.mxu0 %v482
    %690 = vmatpush.msra.mxu0 %v479
    %691 = vmatpush.msra.mxu0 %v476
    %692 = vmatmul.f32.gmra.mxu0 %v633
    %v693 = vpop.f32.mrf.mxu0
    %v694 = vadd.f32 0.0, %v693
    %695 = vdwg.mxu0
    %v696 = vadd.f32 %v372, %v654
    %v697 = vxor.u32 %v696, 2147483648
    %v698 = vmul.f32 %v697, 1.442695
    %v699 = vpow.pop %v698
    %v700 = vadd.f32 %v699, 1.0
    %v701 = vrcp.pop %v700
    %v702 = vmul.f32 %v700, %v701
    %v703 = vsub.f32 1.0, %v702
    %v704 = vmul.f32 %v701, %v703
    %v705 = vadd.f32 %v701, %v704
    %vm706 = vweird.f32 %v700
    %vm707 = vweird.f32 %v701
    %vm708 = vmor %vm706, %vm707
    %v709 = vsel %vm708, %v701, %v705
    %v710 = vand.u32 2147483647, %v700
    %vm711 = vcmp.eq.f32.partialorder %v710, 8.507059e+37
    %v712 = vand.u32 %v700, 2147483648
    %v713 = vor.u32 1.1754944e-38, %v712
    %v714 = vsel %vm711, %v713, %v709
    %v715 = vmul.f32 1.0, %v714
    %v716 = vadd.f32 %v413, %v674
    %v717 = vxor.u32 %v716, 2147483648
    %v718 = vmul.f32 %v717, 1.442695
    %v719 = vpow.pop %v718
    %v720 = vadd.f32 %v719, 1.0
    %v721 = vrcp.pop %v720
    %v722 = vmul.f32 %v720, %v721
    %v723 = vsub.f32 1.0, %v722
    %v724 = vmul.f32 %v721, %v723
    %v725 = vadd.f32 %v721, %v724
    %vm726 = vweird.f32 %v720
    %vm727 = vweird.f32 %v721
    %vm728 = vmor %vm726, %vm727
    %v729 = vsel %vm728, %v721, %v725
    %v730 = vand.u32 2147483647, %v720
    %vm731 = vcmp.eq.f32.partialorder %v730, 8.507059e+37
    %v732 = vand.u32 %v720, 2147483648
    %v733 = vor.u32 1.1754944e-38, %v732
    %v734 = vsel %vm731, %v733, %v729
    %v735 = vmul.f32 1.0, %v734
    %v736 = vadd.f32 %v694, %v624
    %v737 = vmul.f32 %v715, %v736
    %v738 = vadd.f32 %v454, %v737
    %v739 = vtanh.pop %v738
    %v740 = vsub.f32 1.0, %v735
    %v741 = vmul.f32 %v740, %v739
    %v742 = vmul.f32 %v735, %v633
    %v743 = vadd.f32 %v741, %v742
    %v744 = vadd.f32 %v743, %v294
    %s745 = scalar_lea.vmem [#allocation10], 8
    %746 = vst [vmem:[%s745] sm:$0xff] %v744
    %747 = vmatpush.msra.mxu0 %v519
    %748 = vmatpush.msra.mxu0 %v516
    %749 = vmatpush.msra.mxu0 %v513
    %750 = vmatpush.msra.mxu0 %v510
    %751 = vmatpush.msra.mxu0 %v507
    %752 = vmatpush.msra.mxu0 %v504
    %753 = vmatpush.msra.mxu0 %v501
    %754 = vmatpush.msra.mxu0 %v498
    %755 = vmatpush.msra.mxu0 %v495
    %756 = vmatpush.msra.mxu0 %v492
    %757 = vmatpush.msra.mxu0 %v489
    %758 = vmatpush.msra.mxu0 %v486
    %759 = vmatpush.msra.mxu0 %v483
    %760 = vmatpush.msra.mxu0 %v480
    %761 = vmatpush.msra.mxu0 %v477
    %762 = vmatpush.msra.mxu0 %v474
    %763 = vmatmul.f32.gmra.mxu0 %v743
    %v764 = vpop.f32.mrf.mxu0
    %v765 = vadd.f32 0.0, %v764
    %766 = vdwg.mxu0
    %767 = vmatpush.msra.mxu0 %v520
    %768 = vmatpush.msra.mxu0 %v517
    %769 = vmatpush.msra.mxu0 %v514
    %770 = vmatpush.msra.mxu0 %v511
    %771 = vmatpush.msra.mxu0 %v508
    %772 = vmatpush.msra.mxu0 %v505
    %773 = vmatpush.msra.mxu0 %v502
    %774 = vmatpush.msra.mxu0 %v499
    %775 = vmatpush.msra.mxu0 %v496
    %776 = vmatpush.msra.mxu0 %v493
    %777 = vmatpush.msra.mxu0 %v490
    %778 = vmatpush.msra.mxu0 %v487
    %779 = vmatpush.msra.mxu0 %v484
    %780 = vmatpush.msra.mxu0 %v481
    %781 = vmatpush.msra.mxu0 %v478
    %782 = vmatpush.msra.mxu0 %v475
    %783 = vmatmul.f32.gmra.mxu0 %v743
    %v784 = vpop.f32.mrf.mxu0
    %v785 = vadd.f32 0.0, %v784
    %786 = vdwg.mxu0
    %787 = vmatpush.msra.mxu0 %v521
    %788 = vmatpush.msra.mxu0 %v518
    %789 = vmatpush.msra.mxu0 %v515
    %790 = vmatpush.msra.mxu0 %v512
    %791 = vmatpush.msra.mxu0 %v509
    %792 = vmatpush.msra.mxu0 %v506
    %793 = vmatpush.msra.mxu0 %v503
    %794 = vmatpush.msra.mxu0 %v500
    %795 = vmatpush.msra.mxu0 %v497
    %796 = vmatpush.msra.mxu0 %v494
    %797 = vmatpush.msra.mxu0 %v491
    %798 = vmatpush.msra.mxu0 %v488
    %799 = vmatpush.msra.mxu0 %v485
    %800 = vmatpush.msra.mxu0 %v482
    %801 = vmatpush.msra.mxu0 %v479
    %802 = vmatpush.msra.mxu0 %v476
    %803 = vmatmul.f32.gmra.mxu0 %v743
    %v804 = vpop.f32.mrf.mxu0
    %v805 = vadd.f32 0.0, %v804
    %806 = vdwg.mxu0
    %v807 = vadd.f32 %v375, %v765
    %v808 = vxor.u32 %v807, 2147483648
    %v809 = vmul.f32 %v808, 1.442695
    %v810 = vpow.pop %v809
    %v811 = vadd.f32 %v810, 1.0
    %v812 = vrcp.pop %v811
    %v813 = vmul.f32 %v811, %v812
    %v814 = vsub.f32 1.0, %v813
    %v815 = vmul.f32 %v812, %v814
    %v816 = vadd.f32 %v812, %v815
    %vm817 = vweird.f32 %v811
    %vm818 = vweird.f32 %v812
    %vm819 = vmor %vm817, %vm818
    %v820 = vsel %vm819, %v812, %v816
    %v821 = vand.u32 2147483647, %v811
    %vm822 = vcmp.eq.f32.partialorder %v821, 8.507059e+37
    %v823 = vand.u32 %v811, 2147483648
    %v824 = vor.u32 1.1754944e-38, %v823
    %v825 = vsel %vm822, %v824, %v820
    %v826 = vmul.f32 1.0, %v825
    %v827 = vadd.f32 %v416, %v785
    %v828 = vxor.u32 %v827, 2147483648
    %v829 = vmul.f32 %v828, 1.442695
    %v830 = vpow.pop %v829
    %v831 = vadd.f32 %v830, 1.0
    %v832 = vrcp.pop %v831
    %v833 = vmul.f32 %v831, %v832
    %v834 = vsub.f32 1.0, %v833
    %v835 = vmul.f32 %v832, %v834
    %v836 = vadd.f32 %v832, %v835
    %vm837 = vweird.f32 %v831
    %vm838 = vweird.f32 %v832
    %vm839 = vmor %vm837, %vm838
    %v840 = vsel %vm839, %v832, %v836
    %v841 = vand.u32 2147483647, %v831
    %vm842 = vcmp.eq.f32.partialorder %v841, 8.507059e+37
    %v843 = vand.u32 %v831, 2147483648
    %v844 = vor.u32 1.1754944e-38, %v843
    %v845 = vsel %vm842, %v844, %v840
    %v846 = vmul.f32 1.0, %v845
    %v847 = vadd.f32 %v805, %v624
    %v848 = vmul.f32 %v826, %v847
    %v849 = vadd.f32 %v457, %v848
    %v850 = vtanh.pop %v849
    %v851 = vsub.f32 1.0, %v846
    %v852 = vmul.f32 %v851, %v850
    %v853 = vmul.f32 %v846, %v743
    %v854 = vadd.f32 %v852, %v853
    %v855 = vadd.f32 %v854, %v294
    %s856 = scalar_lea.vmem [#allocation10], 16
    %857 = vst [vmem:[%s856] sm:$0xff] %v855
    %858 = vmatpush.msra.mxu0 %v519
    %859 = vmatpush.msra.mxu0 %v516
    %860 = vmatpush.msra.mxu0 %v513
    %861 = vmatpush.msra.mxu0 %v510
    %862 = vmatpush.msra.mxu0 %v507
    %863 = vmatpush.msra.mxu0 %v504
    %864 = vmatpush.msra.mxu0 %v501
    %865 = vmatpush.msra.mxu0 %v498
    %866 = vmatpush.msra.mxu0 %v495
    %867 = vmatpush.msra.mxu0 %v492
    %868 = vmatpush.msra.mxu0 %v489
    %869 = vmatpush.msra.mxu0 %v486
    %870 = vmatpush.msra.mxu0 %v483
    %871 = vmatpush.msra.mxu0 %v480
    %872 = vmatpush.msra.mxu0 %v477
    %873 = vmatpush.msra.mxu0 %v474
    %874 = vmatmul.f32.gmra.mxu0 %v854
    %v875 = vpop.f32.mrf.mxu0
    %v876 = vadd.f32 0.0, %v875
    %877 = vdwg.mxu0
    %878 = vmatpush.msra.mxu0 %v520
    %879 = vmatpush.msra.mxu0 %v517
    %880 = vmatpush.msra.mxu0 %v514
    %881 = vmatpush.msra.mxu0 %v511
    %882 = vmatpush.msra.mxu0 %v508
    %883 = vmatpush.msra.mxu0 %v505
    %884 = vmatpush.msra.mxu0 %v502
    %885 = vmatpush.msra.mxu0 %v499
    %886 = vmatpush.msra.mxu0 %v496
    %887 = vmatpush.msra.mxu0 %v493
    %888 = vmatpush.msra.mxu0 %v490
    %889 = vmatpush.msra.mxu0 %v487
    %890 = vmatpush.msra.mxu0 %v484
    %891 = vmatpush.msra.mxu0 %v481
    %892 = vmatpush.msra.mxu0 %v478
    %893 = vmatpush.msra.mxu0 %v475
    %894 = vmatmul.f32.gmra.mxu0 %v854
    %v895 = vpop.f32.mrf.mxu0
    %v896 = vadd.f32 0.0, %v895
    %897 = vdwg.mxu0
    %898 = vmatpush.msra.mxu0 %v521
    %899 = vmatpush.msra.mxu0 %v518
    %900 = vmatpush.msra.mxu0 %v515
    %901 = vmatpush.msra.mxu0 %v512
    %902 = vmatpush.msra.mxu0 %v509
    %903 = vmatpush.msra.mxu0 %v506
    %904 = vmatpush.msra.mxu0 %v503
    %905 = vmatpush.msra.mxu0 %v500
    %906 = vmatpush.msra.mxu0 %v497
    %907 = vmatpush.msra.mxu0 %v494
    %908 = vmatpush.msra.mxu0 %v491
    %909 = vmatpush.msra.mxu0 %v488
    %910 = vmatpush.msra.mxu0 %v485
    %911 = vmatpush.msra.mxu0 %v482
    %912 = vmatpush.msra.mxu0 %v479
    %913 = vmatpush.msra.mxu0 %v476
    %914 = vmatmul.f32.gmra.mxu0 %v854
    %v915 = vpop.f32.mrf.mxu0
    %v916 = vadd.f32 0.0, %v915
    %917 = vdwg.mxu0
    %v918 = vadd.f32 %v378, %v876
    %v919 = vxor.u32 %v918, 2147483648
    %v920 = vmul.f32 %v919, 1.442695
    %v921 = vpow.pop %v920
    %v922 = vadd.f32 %v921, 1.0
    %v923 = vrcp.pop %v922
    %v924 = vmul.f32 %v922, %v923
    %v925 = vsub.f32 1.0, %v924
    %v926 = vmul.f32 %v923, %v925
    %v927 = vadd.f32 %v923, %v926
    %vm928 = vweird.f32 %v922
    %vm929 = vweird.f32 %v923
    %vm930 = vmor %vm928, %vm929
    %v931 = vsel %vm930, %v923, %v927
    %v932 = vand.u32 2147483647, %v922
    %vm933 = vcmp.eq.f32.partialorder %v932, 8.507059e+37
    %v934 = vand.u32 %v922, 2147483648
    %v935 = vor.u32 1.1754944e-38, %v934
    %v936 = vsel %vm933, %v935, %v931
    %v937 = vmul.f32 1.0, %v936
    %v938 = vadd.f32 %v419, %v896
    %v939 = vxor.u32 %v938, 2147483648
    %v940 = vmul.f32 %v939, 1.442695
    %v941 = vpow.pop %v940
    %v942 = vadd.f32 %v941, 1.0
    %v943 = vrcp.pop %v942
    %v944 = vmul.f32 %v942, %v943
    %v945 = vsub.f32 1.0, %v944
    %v946 = vmul.f32 %v943, %v945
    %v947 = vadd.f32 %v943, %v946
    %vm948 = vweird.f32 %v942
    %vm949 = vweird.f32 %v943
    %vm950 = vmor %vm948, %vm949
    %v951 = vsel %vm950, %v943, %v947
    %v952 = vand.u32 2147483647, %v942
    %vm953 = vcmp.eq.f32.partialorder %v952, 8.507059e+37
    %v954 = vand.u32 %v942, 2147483648
    %v955 = vor.u32 1.1754944e-38, %v954
    %v956 = vsel %vm953, %v955, %v951
    %v957 = vmul.f32 1.0, %v956
    %v958 = vadd.f32 %v916, %v624
    %v959 = vmul.f32 %v937, %v958
    %v960 = vadd.f32 %v460, %v959
    %v961 = vtanh.pop %v960
    %v962 = vsub.f32 1.0, %v957
    %v963 = vmul.f32 %v962, %v961
    %v964 = vmul.f32 %v957, %v854
    %v965 = vadd.f32 %v963, %v964
    %v966 = vadd.f32 %v965, %v294
    %s967 = scalar_lea.vmem [#allocation10], 24
    %968 = vst [vmem:[%s967] sm:$0xff] %v966
    %969 = vmatpush.msra.mxu0 %v519
    %970 = vmatpush.msra.mxu0 %v516
    %971 = vmatpush.msra.mxu0 %v513
    %972 = vmatpush.msra.mxu0 %v510
    %973 = vmatpush.msra.mxu0 %v507
    %974 = vmatpush.msra.mxu0 %v504
    %975 = vmatpush.msra.mxu0 %v501
    %976 = vmatpush.msra.mxu0 %v498
    %977 = vmatpush.msra.mxu0 %v495
    %978 = vmatpush.msra.mxu0 %v492
    %979 = vmatpush.msra.mxu0 %v489
    %980 = vmatpush.msra.mxu0 %v486
    %981 = vmatpush.msra.mxu0 %v483
    %982 = vmatpush.msra.mxu0 %v480
    %983 = vmatpush.msra.mxu0 %v477
    %984 = vmatpush.msra.mxu0 %v474
    %985 = vmatmul.f32.gmra.mxu0 %v965
    %v986 = vpop.f32.mrf.mxu0
    %v987 = vadd.f32 0.0, %v986
    %988 = vdwg.mxu0
    %989 = vmatpush.msra.mxu0 %v520
    %990 = vmatpush.msra.mxu0 %v517
    %991 = vmatpush.msra.mxu0 %v514
    %992 = vmatpush.msra.mxu0 %v511
    %993 = vmatpush.msra.mxu0 %v508
    %994 = vmatpush.msra.mxu0 %v505
    %995 = vmatpush.msra.mxu0 %v502
    %996 = vmatpush.msra.mxu0 %v499
    %997 = vmatpush.msra.mxu0 %v496
    %998 = vmatpush.msra.mxu0 %v493
    %999 = vmatpush.msra.mxu0 %v490
    %1000 = vmatpush.msra.mxu0 %v487
    %1001 = vmatpush.msra.mxu0 %v484
    %1002 = vmatpush.msra.mxu0 %v481
    %1003 = vmatpush.msra.mxu0 %v478
    %1004 = vmatpush.msra.mxu0 %v475
    %1005 = vmatmul.f32.gmra.mxu0 %v965
    %v1006 = vpop.f32.mrf.mxu0
    %v1007 = vadd.f32 0.0, %v1006
    %1008 = vdwg.mxu0
    %1009 = vmatpush.msra.mxu0 %v521
    %1010 = vmatpush.msra.mxu0 %v518
    %1011 = vmatpush.msra.mxu0 %v515
    %1012 = vmatpush.msra.mxu0 %v512
    %1013 = vmatpush.msra.mxu0 %v509
    %1014 = vmatpush.msra.mxu0 %v506
    %1015 = vmatpush.msra.mxu0 %v503
    %1016 = vmatpush.msra.mxu0 %v500
    %1017 = vmatpush.msra.mxu0 %v497
    %1018 = vmatpush.msra.mxu0 %v494
    %1019 = vmatpush.msra.mxu0 %v491
    %1020 = vmatpush.msra.mxu0 %v488
    %1021 = vmatpush.msra.mxu0 %v485
    %1022 = vmatpush.msra.mxu0 %v482
    %1023 = vmatpush.msra.mxu0 %v479
    %1024 = vmatpush.msra.mxu0 %v476
    %1025 = vmatmul.f32.gmra.mxu0 %v965
    %v1026 = vpop.f32.mrf.mxu0
    %v1027 = vadd.f32 0.0, %v1026
    %1028 = vdwg.mxu0
    %v1029 = vadd.f32 %v381, %v987
    %v1030 = vxor.u32 %v1029, 2147483648
    %v1031 = vmul.f32 %v1030, 1.442695
    %v1032 = vpow.pop %v1031
    %v1033 = vadd.f32 %v1032, 1.0
    %v1034 = vrcp.pop %v1033
    %v1035 = vmul.f32 %v1033, %v1034
    %v1036 = vsub.f32 1.0, %v1035
    %v1037 = vmul.f32 %v1034, %v1036
    %v1038 = vadd.f32 %v1034, %v1037
    %vm1039 = vweird.f32 %v1033
    %vm1040 = vweird.f32 %v1034
    %vm1041 = vmor %vm1039, %vm1040
    %v1042 = vsel %vm1041, %v1034, %v1038
    %v1043 = vand.u32 2147483647, %v1033
    %vm1044 = vcmp.eq.f32.partialorder %v1043, 8.507059e+37
    %v1045 = vand.u32 %v1033, 2147483648
    %v1046 = vor.u32 1.1754944e-38, %v1045
    %v1047 = vsel %vm1044, %v1046, %v1042
    %v1048 = vmul.f32 1.0, %v1047
    %v1049 = vadd.f32 %v422, %v1007
    %v1050 = vxor.u32 %v1049, 2147483648
    %v1051 = vmul.f32 %v1050, 1.442695
    %v1052 = vpow.pop %v1051
    %v1053 = vadd.f32 %v1052, 1.0
    %v1054 = vrcp.pop %v1053
    %v1055 = vmul.f32 %v1053, %v1054
    %v1056 = vsub.f32 1.0, %v1055
    %v1057 = vmul.f32 %v1054, %v1056
    %v1058 = vadd.f32 %v1054, %v1057
    %vm1059 = vweird.f32 %v1053
    %vm1060 = vweird.f32 %v1054
    %vm1061 = vmor %vm1059, %vm1060
    %v1062 = vsel %vm1061, %v1054, %v1058
    %v1063 = vand.u32 2147483647, %v1053
    %vm1064 = vcmp.eq.f32.partialorder %v1063, 8.507059e+37
    %v1065 = vand.u32 %v1053, 2147483648
    %v1066 = vor.u32 1.1754944e-38, %v1065
    %v1067 = vsel %vm1064, %v1066, %v1062
    %v1068 = vmul.f32 1.0, %v1067
    %v1069 = vadd.f32 %v1027, %v624
    %v1070 = vmul.f32 %v1048, %v1069
    %v1071 = vadd.f32 %v463, %v1070
    %v1072 = vtanh.pop %v1071
    %v1073 = vsub.f32 1.0, %v1068
    %v1074 = vmul.f32 %v1073, %v1072
    %v1075 = vmul.f32 %v1068, %v965
    %v1076 = vadd.f32 %v1074, %v1075
    %v1077 = vadd.f32 %v1076, %v294
    %s1078 = scalar_lea.vmem [#allocation10], 32
    %1079 = vst [vmem:[%s1078] sm:$0xff] %v1077
    %1080 = vmatpush.msra.mxu0 %v519
    %1081 = vmatpush.msra.mxu0 %v516
    %1082 = vmatpush.msra.mxu0 %v513
    %1083 = vmatpush.msra.mxu0 %v510
    %1084 = vmatpush.msra.mxu0 %v507
    %1085 = vmatpush.msra.mxu0 %v504
    %1086 = vmatpush.msra.mxu0 %v501
    %1087 = vmatpush.msra.mxu0 %v498
    %1088 = vmatpush.msra.mxu0 %v495
    %1089 = vmatpush.msra.mxu0 %v492
    %1090 = vmatpush.msra.mxu0 %v489
    %1091 = vmatpush.msra.mxu0 %v486
    %1092 = vmatpush.msra.mxu0 %v483
    %1093 = vmatpush.msra.mxu0 %v480
    %1094 = vmatpush.msra.mxu0 %v477
    %1095 = vmatpush.msra.mxu0 %v474
    %1096 = vmatmul.f32.gmra.mxu0 %v1076
    %v1097 = vpop.f32.mrf.mxu0
    %v1098 = vadd.f32 0.0, %v1097
    %1099 = vdwg.mxu0
    %1100 = vmatpush.msra.mxu0 %v520
    %1101 = vmatpush.msra.mxu0 %v517
    %1102 = vmatpush.msra.mxu0 %v514
    %1103 = vmatpush.msra.mxu0 %v511
    %1104 = vmatpush.msra.mxu0 %v508
    %1105 = vmatpush.msra.mxu0 %v505
    %1106 = vmatpush.msra.mxu0 %v502
    %1107 = vmatpush.msra.mxu0 %v499
    %1108 = vmatpush.msra.mxu0 %v496
    %1109 = vmatpush.msra.mxu0 %v493
    %1110 = vmatpush.msra.mxu0 %v490
    %1111 = vmatpush.msra.mxu0 %v487
    %1112 = vmatpush.msra.mxu0 %v484
    %1113 = vmatpush.msra.mxu0 %v481
    %1114 = vmatpush.msra.mxu0 %v478
    %1115 = vmatpush.msra.mxu0 %v475
    %1116 = vmatmul.f32.gmra.mxu0 %v1076
    %v1117 = vpop.f32.mrf.mxu0
    %v1118 = vadd.f32 0.0, %v1117
    %1119 = vdwg.mxu0
    %1120 = vmatpush.msra.mxu0 %v521
    %1121 = vmatpush.msra.mxu0 %v518
    %1122 = vmatpush.msra.mxu0 %v515
    %1123 = vmatpush.msra.mxu0 %v512
    %1124 = vmatpush.msra.mxu0 %v509
    %1125 = vmatpush.msra.mxu0 %v506
    %1126 = vmatpush.msra.mxu0 %v503
    %1127 = vmatpush.msra.mxu0 %v500
    %1128 = vmatpush.msra.mxu0 %v497
    %1129 = vmatpush.msra.mxu0 %v494
    %1130 = vmatpush.msra.mxu0 %v491
    %1131 = vmatpush.msra.mxu0 %v488
    %1132 = vmatpush.msra.mxu0 %v485
    %1133 = vmatpush.msra.mxu0 %v482
    %1134 = vmatpush.msra.mxu0 %v479
    %1135 = vmatpush.msra.mxu0 %v476
    %1136 = vmatmul.f32.gmra.mxu0 %v1076
    %v1137 = vpop.f32.mrf.mxu0
    %v1138 = vadd.f32 0.0, %v1137
    %1139 = vdwg.mxu0
    %v1140 = vadd.f32 %v384, %v1098
    %v1141 = vxor.u32 %v1140, 2147483648
    %v1142 = vmul.f32 %v1141, 1.442695
    %v1143 = vpow.pop %v1142
    %v1144 = vadd.f32 %v1143, 1.0
    %v1145 = vrcp.pop %v1144
    %v1146 = vmul.f32 %v1144, %v1145
    %v1147 = vsub.f32 1.0, %v1146
    %v1148 = vmul.f32 %v1145, %v1147
    %v1149 = vadd.f32 %v1145, %v1148
    %vm1150 = vweird.f32 %v1144
    %vm1151 = vweird.f32 %v1145
    %vm1152 = vmor %vm1150, %vm1151
    %v1153 = vsel %vm1152, %v1145, %v1149
    %v1154 = vand.u32 2147483647, %v1144
    %vm1155 = vcmp.eq.f32.partialorder %v1154, 8.507059e+37
    %v1156 = vand.u32 %v1144, 2147483648
    %v1157 = vor.u32 1.1754944e-38, %v1156
    %v1158 = vsel %vm1155, %v1157, %v1153
    %v1159 = vmul.f32 1.0, %v1158
    %v1160 = vadd.f32 %v425, %v1118
    %v1161 = vxor.u32 %v1160, 2147483648
    %v1162 = vmul.f32 %v1161, 1.442695
    %v1163 = vpow.pop %v1162
    %v1164 = vadd.f32 %v1163, 1.0
    %v1165 = vrcp.pop %v1164
    %v1166 = vmul.f32 %v1164, %v1165
    %v1167 = vsub.f32 1.0, %v1166
    %v1168 = vmul.f32 %v1165, %v1167
    %v1169 = vadd.f32 %v1165, %v1168
    %vm1170 = vweird.f32 %v1164
    %vm1171 = vweird.f32 %v1165
    %vm1172 = vmor %vm1170, %vm1171
    %v1173 = vsel %vm1172, %v1165, %v1169
    %v1174 = vand.u32 2147483647, %v1164
    %vm1175 = vcmp.eq.f32.partialorder %v1174, 8.507059e+37
    %v1176 = vand.u32 %v1164, 2147483648
    %v1177 = vor.u32 1.1754944e-38, %v1176
    %v1178 = vsel %vm1175, %v1177, %v1173
    %v1179 = vmul.f32 1.0, %v1178
    %v1180 = vadd.f32 %v1138, %v624
    %v1181 = vmul.f32 %v1159, %v1180
    %v1182 = vadd.f32 %v466, %v1181
    %v1183 = vtanh.pop %v1182
    %v1184 = vsub.f32 1.0, %v1179
    %v1185 = vmul.f32 %v1184, %v1183
    %v1186 = vmul.f32 %v1179, %v1076
    %v1187 = vadd.f32 %v1185, %v1186
    %v1188 = vadd.f32 %v1187, %v294
    %s1189 = scalar_lea.vmem [#allocation10], 40
    %1190 = vst [vmem:[%s1189] sm:$0xff] %v1188
    %1191 = vmatpush.msra.mxu0 %v519
    %1192 = vmatpush.msra.mxu0 %v516
    %1193 = vmatpush.msra.mxu0 %v513
    %1194 = vmatpush.msra.mxu0 %v510
    %1195 = vmatpush.msra.mxu0 %v507
    %1196 = vmatpush.msra.mxu0 %v504
    %1197 = vmatpush.msra.mxu0 %v501
    %1198 = vmatpush.msra.mxu0 %v498
    %1199 = vmatpush.msra.mxu0 %v495
    %1200 = vmatpush.msra.mxu0 %v492
    %1201 = vmatpush.msra.mxu0 %v489
    %1202 = vmatpush.msra.mxu0 %v486
    %1203 = vmatpush.msra.mxu0 %v483
    %1204 = vmatpush.msra.mxu0 %v480
    %1205 = vmatpush.msra.mxu0 %v477
    %1206 = vmatpush.msra.mxu0 %v474
    %1207 = vmatmul.f32.gmra.mxu0 %v1187
    %v1208 = vpop.f32.mrf.mxu0
    %v1209 = vadd.f32 0.0, %v1208
    %1210 = vdwg.mxu0
    %1211 = vmatpush.msra.mxu0 %v520
    %1212 = vmatpush.msra.mxu0 %v517
    %1213 = vmatpush.msra.mxu0 %v514
    %1214 = vmatpush.msra.mxu0 %v511
    %1215 = vmatpush.msra.mxu0 %v508
    %1216 = vmatpush.msra.mxu0 %v505
    %1217 = vmatpush.msra.mxu0 %v502
    %1218 = vmatpush.msra.mxu0 %v499
    %1219 = vmatpush.msra.mxu0 %v496
    %1220 = vmatpush.msra.mxu0 %v493
    %1221 = vmatpush.msra.mxu0 %v490
    %1222 = vmatpush.msra.mxu0 %v487
    %1223 = vmatpush.msra.mxu0 %v484
    %1224 = vmatpush.msra.mxu0 %v481
    %1225 = vmatpush.msra.mxu0 %v478
    %1226 = vmatpush.msra.mxu0 %v475
    %1227 = vmatmul.f32.gmra.mxu0 %v1187
    %v1228 = vpop.f32.mrf.mxu0
    %v1229 = vadd.f32 0.0, %v1228
    %1230 = vdwg.mxu0
    %1231 = vmatpush.msra.mxu0 %v521
    %1232 = vmatpush.msra.mxu0 %v518
    %1233 = vmatpush.msra.mxu0 %v515
    %1234 = vmatpush.msra.mxu0 %v512
    %1235 = vmatpush.msra.mxu0 %v509
    %1236 = vmatpush.msra.mxu0 %v506
    %1237 = vmatpush.msra.mxu0 %v503
    %1238 = vmatpush.msra.mxu0 %v500
    %1239 = vmatpush.msra.mxu0 %v497
    %1240 = vmatpush.msra.mxu0 %v494
    %1241 = vmatpush.msra.mxu0 %v491
    %1242 = vmatpush.msra.mxu0 %v488
    %1243 = vmatpush.msra.mxu0 %v485
    %1244 = vmatpush.msra.mxu0 %v482
    %1245 = vmatpush.msra.mxu0 %v479
    %1246 = vmatpush.msra.mxu0 %v476
    %1247 = vmatmul.f32.gmra.mxu0 %v1187
    %v1248 = vpop.f32.mrf.mxu0
    %v1249 = vadd.f32 0.0, %v1248
    %1250 = vdwg.mxu0
    %v1251 = vadd.f32 %v387, %v1209
    %v1252 = vxor.u32 %v1251, 2147483648
    %v1253 = vmul.f32 %v1252, 1.442695
    %v1254 = vpow.pop %v1253
    %v1255 = vadd.f32 %v1254, 1.0
    %v1256 = vrcp.pop %v1255
    %v1257 = vmul.f32 %v1255, %v1256
    %v1258 = vsub.f32 1.0, %v1257
    %v1259 = vmul.f32 %v1256, %v1258
    %v1260 = vadd.f32 %v1256, %v1259
    %vm1261 = vweird.f32 %v1255
    %vm1262 = vweird.f32 %v1256
    %vm1263 = vmor %vm1261, %vm1262
    %v1264 = vsel %vm1263, %v1256, %v1260
    %v1265 = vand.u32 2147483647, %v1255
    %vm1266 = vcmp.eq.f32.partialorder %v1265, 8.507059e+37
    %v1267 = vand.u32 %v1255, 2147483648
    %v1268 = vor.u32 1.1754944e-38, %v1267
    %v1269 = vsel %vm1266, %v1268, %v1264
    %v1270 = vmul.f32 1.0, %v1269
    %v1271 = vadd.f32 %v428, %v1229
    %v1272 = vxor.u32 %v1271, 2147483648
    %v1273 = vmul.f32 %v1272, 1.442695
    %v1274 = vpow.pop %v1273
    %v1275 = vadd.f32 %v1274, 1.0
    %v1276 = vrcp.pop %v1275
    %v1277 = vmul.f32 %v1275, %v1276
    %v1278 = vsub.f32 1.0, %v1277
    %v1279 = vmul.f32 %v1276, %v1278
    %v1280 = vadd.f32 %v1276, %v1279
    %vm1281 = vweird.f32 %v1275
    %vm1282 = vweird.f32 %v1276
    %vm1283 = vmor %vm1281, %vm1282
    %v1284 = vsel %vm1283, %v1276, %v1280
    %v1285 = vand.u32 2147483647, %v1275
    %vm1286 = vcmp.eq.f32.partialorder %v1285, 8.507059e+37
    %v1287 = vand.u32 %v1275, 2147483648
    %v1288 = vor.u32 1.1754944e-38, %v1287
    %v1289 = vsel %vm1286, %v1288, %v1284
    %v1290 = vmul.f32 1.0, %v1289
    %v1291 = vadd.f32 %v1249, %v624
    %v1292 = vmul.f32 %v1270, %v1291
    %v1293 = vadd.f32 %v469, %v1292
    %v1294 = vtanh.pop %v1293
    %v1295 = vsub.f32 1.0, %v1290
    %v1296 = vmul.f32 %v1295, %v1294
    %v1297 = vmul.f32 %v1290, %v1187
    %v1298 = vadd.f32 %v1296, %v1297
    %v1299 = vadd.f32 %v1298, %v294
    %s1300 = scalar_lea.vmem [#allocation10], 48
    %1301 = vst [vmem:[%s1300] sm:$0xff] %v1299
    %1302 = vmatpush.msra.mxu0 %v519
    %1303 = vmatpush.msra.mxu0 %v516
    %1304 = vmatpush.msra.mxu0 %v513
    %1305 = vmatpush.msra.mxu0 %v510
    %1306 = vmatpush.msra.mxu0 %v507
    %1307 = vmatpush.msra.mxu0 %v504
    %1308 = vmatpush.msra.mxu0 %v501
    %1309 = vmatpush.msra.mxu0 %v498
    %1310 = vmatpush.msra.mxu0 %v495
    %1311 = vmatpush.msra.mxu0 %v492
    %1312 = vmatpush.msra.mxu0 %v489
    %1313 = vmatpush.msra.mxu0 %v486
    %1314 = vmatpush.msra.mxu0 %v483
    %1315 = vmatpush.msra.mxu0 %v480
    %1316 = vmatpush.msra.mxu0 %v477
    %1317 = vmatpush.msra.mxu0 %v474
    %1318 = vmatmul.f32.gmra.mxu0 %v1298
    %v1319 = vpop.f32.mrf.mxu0
    %v1320 = vadd.f32 0.0, %v1319
    %1321 = vdwg.mxu0
    %1322 = vmatpush.msra.mxu0 %v520
    %1323 = vmatpush.msra.mxu0 %v517
    %1324 = vmatpush.msra.mxu0 %v514
    %1325 = vmatpush.msra.mxu0 %v511
    %1326 = vmatpush.msra.mxu0 %v508
    %1327 = vmatpush.msra.mxu0 %v505
    %1328 = vmatpush.msra.mxu0 %v502
    %1329 = vmatpush.msra.mxu0 %v499
    %1330 = vmatpush.msra.mxu0 %v496
    %1331 = vmatpush.msra.mxu0 %v493
    %1332 = vmatpush.msra.mxu0 %v490
    %1333 = vmatpush.msra.mxu0 %v487
    %1334 = vmatpush.msra.mxu0 %v484
    %1335 = vmatpush.msra.mxu0 %v481
    %1336 = vmatpush.msra.mxu0 %v478
    %1337 = vmatpush.msra.mxu0 %v475
    %1338 = vmatmul.f32.gmra.mxu0 %v1298
    %v1339 = vpop.f32.mrf.mxu0
    %v1340 = vadd.f32 0.0, %v1339
    %1341 = vdwg.mxu0
    %1342 = vmatpush.msra.mxu0 %v521
    %1343 = vmatpush.msra.mxu0 %v518
    %1344 = vmatpush.msra.mxu0 %v515
    %1345 = vmatpush.msra.mxu0 %v512
    %1346 = vmatpush.msra.mxu0 %v509
    %1347 = vmatpush.msra.mxu0 %v506
    %1348 = vmatpush.msra.mxu0 %v503
    %1349 = vmatpush.msra.mxu0 %v500
    %1350 = vmatpush.msra.mxu0 %v497
    %1351 = vmatpush.msra.mxu0 %v494
    %1352 = vmatpush.msra.mxu0 %v491
    %1353 = vmatpush.msra.mxu0 %v488
    %1354 = vmatpush.msra.mxu0 %v485
    %1355 = vmatpush.msra.mxu0 %v482
    %1356 = vmatpush.msra.mxu0 %v479
    %1357 = vmatpush.msra.mxu0 %v476
    %1358 = vmatmul.f32.gmra.mxu0 %v1298
    %v1359 = vpop.f32.mrf.mxu0
    %v1360 = vadd.f32 0.0, %v1359
    %1361 = vdwg.mxu0
    %v1362 = vadd.f32 %v390, %v1320
    %v1363 = vxor.u32 %v1362, 2147483648
    %v1364 = vmul.f32 %v1363, 1.442695
    %v1365 = vpow.pop %v1364
    %v1366 = vadd.f32 %v1365, 1.0
    %v1367 = vrcp.pop %v1366
    %v1368 = vmul.f32 %v1366, %v1367
    %v1369 = vsub.f32 1.0, %v1368
    %v1370 = vmul.f32 %v1367, %v1369
    %v1371 = vadd.f32 %v1367, %v1370
    %vm1372 = vweird.f32 %v1366
    %vm1373 = vweird.f32 %v1367
    %vm1374 = vmor %vm1372, %vm1373
    %v1375 = vsel %vm1374, %v1367, %v1371
    %v1376 = vand.u32 2147483647, %v1366
    %vm1377 = vcmp.eq.f32.partialorder %v1376, 8.507059e+37
    %v1378 = vand.u32 %v1366, 2147483648
    %v1379 = vor.u32 1.1754944e-38, %v1378
    %v1380 = vsel %vm1377, %v1379, %v1375
    %v1381 = vmul.f32 1.0, %v1380
    %v1382 = vadd.f32 %v431, %v1340
    %v1383 = vxor.u32 %v1382, 2147483648
    %v1384 = vmul.f32 %v1383, 1.442695
    %v1385 = vpow.pop %v1384
    %v1386 = vadd.f32 %v1385, 1.0
    %v1387 = vrcp.pop %v1386
    %v1388 = vmul.f32 %v1386, %v1387
    %v1389 = vsub.f32 1.0, %v1388
    %v1390 = vmul.f32 %v1387, %v1389
    %v1391 = vadd.f32 %v1387, %v1390
    %vm1392 = vweird.f32 %v1386
    %vm1393 = vweird.f32 %v1387
    %vm1394 = vmor %vm1392, %vm1393
    %v1395 = vsel %vm1394, %v1387, %v1391
    %v1396 = vand.u32 2147483647, %v1386
    %vm1397 = vcmp.eq.f32.partialorder %v1396, 8.507059e+37
    %v1398 = vand.u32 %v1386, 2147483648
    %v1399 = vor.u32 1.1754944e-38, %v1398
    %v1400 = vsel %vm1397, %v1399, %v1395
    %v1401 = vmul.f32 1.0, %v1400
    %v1402 = vadd.f32 %v1360, %v624
    %v1403 = vmul.f32 %v1381, %v1402
    %v1404 = vadd.f32 %v472, %v1403
    %v1405 = vtanh.pop %v1404
    %v1406 = vsub.f32 1.0, %v1401
    %v1407 = vmul.f32 %v1406, %v1405
    %v1408 = vmul.f32 %v1401, %v1298
    %v1409 = vadd.f32 %v1407, %v1408
    %v1410 = vadd.f32 %v1409, %v294
    %s1411 = scalar_lea.vmem [#allocation10], 56
    %1412 = vst [vmem:[%s1411] sm:$0xff] %v1410
    // Predicated region
    $region50: #{tpu_custom_call.1} parent=1 // pred_check
      _
    $region51: #{tpu_custom_call.1} parent=1 // pred_check_branch
      %1414 = sbr.rel (0) target = $region53
    $region52: #{tpu_custom_call.1} parent=1 // pred_region
      %1416 = vsyncadd [#allocation4], 0
      %s1417 = sshll.u32 [#allocation10], 4
      %s1418 = int_to_ptr.vmem [resolvable:$true] %s1417
      %s1419 = sshll.u32 %s8, 4
      %s1420 = int_to_ptr.hbm [resolvable:$true] %s1419
      %1425 = dma.vmem_to_hbm [thread:$0]  %s1418, 1024, %s1420, [#allocation4], 128, 128, 8
    $region53: #{tpu_custom_call.1} parent=1 // pred_fallthru
      _
    // Predicated region
    $region54: #{tpu_custom_call.1} parent=1 // pred_check
      _
    $region55: #{tpu_custom_call.1} parent=1 // pred_check_branch
      %1427 = sbr.rel (0) target = $region57
    $region56: #{tpu_custom_call.1} parent=1 // pred_region
      %1429 = dma.done [#allocation4], 1024
    $region57: #{tpu_custom_call.1} parent=1 // pred_fallthru
      _
    %1430 = vsyncpa [#allocation3], 1
    %1431 = vsyncpa [#allocation6], 1
    %1432 = vsyncpa [#allocation9], 1
    %1433 = vsyncpa [#allocation4], 1

</llo_original>
